<compile_context>
chip_gen: v5e
topology: v5e:2x2
jax: 0.10.0
libtpu: 0.0.40
codegen_flags: <defaults>
</compile_context>

<pallas_src>
from functools import partial

import jax
import jax.numpy as jnp
import numpy as np
from jax.experimental import pallas as pl
from jax.experimental.pallas import tpu as pltpu

LANE = 128


def _ru(x, m=LANE):
    return (x + m - 1) // m * m


def _pad2(a, rows, cols):
    """Zero-pad a 2-D array to (rows, cols) (exact: padded entries stay 0)."""
    return jnp.zeros((rows, cols), a.dtype).at[: a.shape[0], : a.shape[1]].set(a)


def _pick_b_tile(batch):
    """Largest batch tile <= 8 dividing `batch` while keeping >= 2 grid steps
    (so both v7x TensorCores get work under dimension_semantics=('parallel',))."""
    for bt in (8, 4, 2):
        if batch % bt == 0 and batch // bt >= 2:
            return bt
    return 1


def prepare_params(params):
    """One-time (load-time) parameter prep: zero lane-pad H->Hp (exact), fuse the two
    output-projection weights into one [Wc; Wh] stack, cast MXU operands to bf16."""
    E, H = params["enc_w"].shape
    Hp = _ru(H)
    wc = _pad2(params["wc"], Hp, Hp)
    wh = _pad2(params["wh"], Hp, Hp)
    return {
        # Embedding tables stay at unpadded E (gathered outside the kernel), bf16 in HBM.
        "enc_emb": params["enc_emb"].astype(jnp.bfloat16),         # (V, E)
        "dec_emb": params["dec_emb"].astype(jnp.bfloat16),         # (V, E)
        "enc_w": _pad2(params["enc_w"], E, Hp).astype(jnp.bfloat16),   # (E, Hp)
        "dec_w": _pad2(params["dec_w"], E, Hp).astype(jnp.bfloat16),   # (E, Hp)
        "wcwh": jnp.concatenate([wc, wh], axis=0).astype(jnp.bfloat16),  # (2*Hp, Hp)
        # Biases stay f32 (added after f32 accumulation).
        "enc_b": _pad2(params["enc_b"].reshape(1, -1), 1, Hp),
        "dec_b": _pad2(params["dec_b"].reshape(1, -1), 1, Hp),
        "bo": _pad2(params["bo"].reshape(1, -1), 1, Hp),
    }


# ----------------------------------------------------------------------------
# Fused forward kernel: one grid step handles a tile of BT batch elements.
# ----------------------------------------------------------------------------
def _nmt_fused_kernel(lengths_ref,                    # scalar prefetch, SMEM (B,) int32
                      emb_src_ref, emb_tgt_ref,       # (BT,S,E) bf16, (BT,T,E) bf16
                      enc_w_ref, dec_w_ref,           # (E,Hp) bf16
                      wcwh_ref,                       # (2*Hp,Hp) bf16  == [Wc; Wh]
                      enc_b_ref, dec_b_ref, bo_ref,   # (1,Hp) f32
                      out_ref, attn_ref):             # (BT,T,Hp) f32, (BT,T,S) f32
    BT, S, E = emb_src_ref.shape
    T = emb_tgt_ref.shape[1]
    b0 = pl.program_id(0) * BT
    f32, bf16 = jnp.float32, jnp.bfloat16
    NEG = jnp.float32(-1e30)

    # ---- encoder projection: all BT memory banks in one MXU pass ----------------
    # Cast to f32 before collapsing the leading dim so the reshape is a plain
    # 8-sublane-aligned re-tiling (value-preserving); MXU operands are bf16 again.
    src2d = emb_src_ref[...].astype(f32).reshape(BT * S, E)
    mem = jnp.tanh(jnp.dot(src2d.astype(bf16), enc_w_ref[...],
                           preferred_element_type=f32) + enc_b_ref[...])   # (BT*S,Hp) f32

    # ---- decoder projection: one MXU pass for all BT*T rows ---------------------
    tgt2d = emb_tgt_ref[...].astype(f32).reshape(BT * T, E)
    dec_base = jnp.tanh(jnp.dot(tgt2d.astype(bf16), dec_w_ref[...],
                                preferred_element_type=f32) + dec_b_ref[...])  # (BT*T,Hp)

    pos = jax.lax.broadcasted_iota(jnp.int32, (T, S), 1)

    # ---- per-batch-element Luong dot attention (statically unrolled, BT small) ---
    ctx_rows, dech_rows = [], []
    for j in range(BT):
        mem_j = mem[j * S:(j + 1) * S, :]                       # (S, Hp) f32
        mem_j_bf = mem_j.astype(bf16)
        enc_state_j = jnp.mean(mem_j, axis=0, keepdims=True)    # (1, Hp) glue init state
        dech_j = dec_base[j * T:(j + 1) * T, :] + enc_state_j   # (T, Hp) f32
        # Contract the lane-full Hp axis of both operands (flash-attn 'qd,kd->qk'
        # pattern; no relayout of mem_j needed).
        scores = jax.lax.dot_general(
            dech_j.astype(bf16), mem_j_bf,
            dimension_numbers=(((1,), (1,)), ((), ())),
            preferred_element_type=f32)                          # (T, S) f32
        scores = jnp.where(pos < lengths_ref[b0 + j], scores, NEG)
        m = jnp.max(scores, axis=-1, keepdims=True)
        e = jnp.exp(scores - m)
        attn = e * pl.reciprocal(jnp.sum(e, axis=-1, keepdims=True), approx=True)
        attn_ref[j] = attn                                       # unpadded (T, S) store
        ctx_rows.append(jnp.dot(attn.astype(bf16), mem_j_bf,
                                preferred_element_type=f32))     # (T, Hp) f32
        dech_rows.append(dech_j)

    # ---- fused output projection: [ctx, dec_h] @ [Wc; Wh], K = 2*Hp = 256 -------
    zh = jnp.concatenate([jnp.concatenate(ctx_rows, axis=0),
                          jnp.concatenate(dech_rows, axis=0)], axis=1)   # (BT*T, 2*Hp)
    out = jnp.tanh(jnp.dot(zh.astype(bf16), wcwh_ref[...],
                           preferred_element_type=f32) + bo_ref[...])    # (BT*T, Hp) f32
    for j in range(BT):
        out_ref[j] = out[j * T:(j + 1) * T, :]                   # lane-dense (T, Hp)


# ----------------------------------------------------------------------------
# NMTModel.forward equivalent
# ----------------------------------------------------------------------------
@partial(jax.jit, static_argnames=("hidden_size", "b_tile", "single_buffer_weights"))
def nmt_forward(prep, src, tgt, lengths, *, hidden_size, b_tile,
                single_buffer_weights=True):
    """src: (S, B) int32, tgt: (Tt, B) int32, lengths: (B,) int32 (pre-cast)."""
    S, B = src.shape
    T = tgt.shape[0] - 1
    E, Hp = prep["enc_w"].shape
    assert B % b_tile == 0, "batch must be divisible by the batch tile"

    # Embedding gathers (glue), batch-major, bf16, E unpadded (4x+2x less DMA than the
    # previous lane-padded f32 version).
    emb_src = prep["enc_emb"][src.T]           # (B, S, E) bf16
    emb_tgt = prep["dec_emb"][tgt[:-1].T]      # (B, T, E) bf16

    use_buffered = single_buffer_weights and hasattr(pl, "Buffered")
    wkw = {"pipeline_mode": pl.Buffered(1)} if use_buffered else {}

    def const_spec(shape):
        nd = len(shape)
        # Grid-invariant weights: constant index map; single-buffered when supported
        # (double-buffering them only doubles their VMEM footprint).
        return pl.BlockSpec(shape, lambda i, ln, _nd=nd: (0,) * _nd, **wkw)

    grid_spec = pltpu.PrefetchScalarGridSpec(
        num_scalar_prefetch=1,
        grid=(B // b_tile,),
        in_specs=[
            pl.BlockSpec((b_tile, S, E), lambda i, ln: (i, 0, 0)),    # emb_src
            pl.BlockSpec((b_tile, T, E), lambda i, ln: (i, 0, 0)),    # emb_tgt
            const_spec((E, Hp)),                                      # enc_w
            const_spec((E, Hp)),                                      # dec_w
            const_spec((2 * Hp, Hp)),                                 # [wc; wh]
            const_spec((1, Hp)),                                      # enc_b
            const_spec((1, Hp)),                                      # dec_b
            const_spec((1, Hp)),                                      # bo
        ],
        out_specs=[
            pl.BlockSpec((b_tile, T, Hp), lambda i, ln: (i, 0, 0)),   # dec_out (lane-dense)
            pl.BlockSpec((b_tile, T, S), lambda i, ln: (i, 0, 0)),    # attn (unpadded S)
        ],
    )

    out_pad, attn = pl.pallas_call(
        _nmt_fused_kernel,
        out_shape=(jax.ShapeDtypeStruct((B, T, Hp), jnp.float32),
                   jax.ShapeDtypeStruct((B, T, S), jnp.float32)),
        grid_spec=grid_spec,
        compiler_params=pltpu.CompilerParams(
            dimension_semantics=("parallel",),
            # Explicit scoped-VMEM limit: above v5e's 16 MiB default, within v7x's
            # 64 MiB physical with headroom.
            vmem_limit_bytes=32 * 1024 * 1024),
    )(lengths, emb_src, emb_tgt,
      prep["enc_w"], prep["dec_w"], prep["wcwh"],
      prep["enc_b"], prep["dec_b"], prep["bo"])

    # Small wrapper transposes back to OpenNMT's (tgt_len-1, batch, ...) layout and a
    # slice to drop the H->Hp lane padding.
    dec_out = jnp.transpose(out_pad, (1, 0, 2))[:, :, :hidden_size]
    attns = {"std": jnp.transpose(attn, (1, 0, 2))}
    return dec_out, attns


# ----------------------------------------------------------------------------
# Pure-JAX f32 reference (for correctness check)
# ----------------------------------------------------------------------------
def nmt_reference(params, src, tgt, lengths):
    hp = jax.lax.Precision.HIGHEST
    emb_src = params["enc_emb"][src]
    mem = jnp.tanh(jnp.einsum("sbe,eh->sbh", emb_src, params["enc_w"],
                              precision=hp) + params["enc_b"])
    enc_state = jnp.mean(mem, axis=0)
    dec_in = tgt[:-1]
    emb_tgt = params["dec_emb"][dec_in]
    dec_h = jnp.tanh(jnp.einsum("tbe,eh->tbh", emb_tgt, params["dec_w"],
                                precision=hp) + params["dec_b"])
    dec_h = dec_h + enc_state[None]
    scores = jnp.einsum("tbh,sbh->bts", dec_h, mem, precision=hp)
    S = mem.shape[0]
    valid = jnp.arange(S)[None, None, :] < lengths[:, None, None]
    scores = jnp.where(valid, scores, -1e30)
    attn = jax.nn.softmax(scores, axis=-1)                               # (B, T, S)
    ctx = jnp.einsum("bts,sbh->bth", attn, mem, precision=hp)
    out = jnp.tanh(jnp.einsum("bth,hk->btk", ctx, params["wc"], precision=hp)
                   + jnp.einsum("tbh,hk->btk", dec_h, params["wh"], precision=hp)
                   + params["bo"])
    return jnp.transpose(out, (1, 0, 2)), {"std": jnp.transpose(attn, (1, 0, 2))}


if __name__ == "__main__":
    VOCAB, E, H = 32, 32, 32
    SRC_LEN, TGT_LEN, B = 8, 9, 8

    key = jax.random.PRNGKey(0)
    ks = jax.random.split(key, 10)
    params = {
        "enc_emb": 0.1 * jax.random.normal(ks[0], (VOCAB, E), jnp.float32),
        "dec_emb": 0.1 * jax.random.normal(ks[1], (VOCAB, E), jnp.float32),
        "enc_w": 0.2 * jax.random.normal(ks[2], (E, H), jnp.float32),
        "enc_b": 0.05 * jax.random.normal(ks[3], (H,), jnp.float32),
        "dec_w": 0.2 * jax.random.normal(ks[4], (E, H), jnp.float32),
        "dec_b": 0.05 * jax.random.normal(ks[5], (H,), jnp.float32),
        "wc": 0.2 * jax.random.normal(ks[6], (H, H), jnp.float32),
        "wh": 0.2 * jax.random.normal(ks[7], (H, H), jnp.float32),
        "bo": 0.05 * jax.random.normal(ks[8], (H,), jnp.float32),
    }

    src = jax.random.randint(ks[9], (SRC_LEN, B), 0, VOCAB, dtype=jnp.int32)
    tgt = jax.random.randint(jax.random.fold_in(key, 99), (TGT_LEN, B), 0, VOCAB,
                             dtype=jnp.int32)
    # Varied, all >= 1, int32 (cast/pad done outside the jitted forward).
    lengths = jnp.array([SRC_LEN - (i % (SRC_LEN - 1)) for i in range(B)],
                        dtype=jnp.int32)

    prep = prepare_params(params)        # one-time load-time prep (pad/fuse/bf16 cast)
    b_tile = _pick_b_tile(B)             # B=8 -> b_tile=4 -> grid=(2,)

    def _run(single_buffer_weights):
        res = nmt_forward(prep, src, tgt, lengths, hidden_size=H, b_tile=b_tile,
                          single_buffer_weights=single_buffer_weights)
        return jax.block_until_ready(res)

    try:
        dec_out, attns = _run(True)
    except Exception:
        # pl.Buffered(1) not supported by this JAX/libtpu combo -> default buffering.
        dec_out, attns = _run(False)

    ref_out, ref_attns = nmt_reference(params, src, tgt, lengths)

    assert dec_out.shape == (TGT_LEN - 1, B, H)
    assert attns["std"].shape == (TGT_LEN - 1, B, SRC_LEN)
    # bf16 MXU operands (f32 accumulation) -> ~1e-2-level agreement with f32 reference.
    np.testing.assert_allclose(np.asarray(dec_out), np.asarray(ref_out),
                               atol=1e-2, rtol=1e-2)
    np.testing.assert_allclose(np.asarray(attns["std"]), np.asarray(ref_attns["std"]),
                               atol=1e-2, rtol=1e-2)
    print("KERNEL_OK")
</pallas_src>

<mosaic_0001>
module attributes {stable_mosaic.version = 11 : i64} {
  func.func @_nmt_fused_kernel(%arg0: i32, %arg1: memref<8xi32, #tpu.memory_space<smem>>, %arg2: memref<4x8x32xbf16, #tpu.memory_space<vmem>>, %arg3: memref<4x8x32xbf16, #tpu.memory_space<vmem>>, %arg4: memref<32x128xbf16, #tpu.memory_space<vmem>>, %arg5: memref<32x128xbf16, #tpu.memory_space<vmem>>, %arg6: memref<256x128xbf16, #tpu.memory_space<vmem>>, %arg7: memref<1x128xf32, #tpu.memory_space<vmem>>, %arg8: memref<1x128xf32, #tpu.memory_space<vmem>>, %arg9: memref<1x128xf32, #tpu.memory_space<vmem>>, %arg10: memref<4x8x128xf32, #tpu.memory_space<vmem>>, %arg11: memref<4x8x8xf32, #tpu.memory_space<vmem>>) attributes {dimension_semantics = [#tpu.dimension_semantics<parallel>], iteration_bounds = array<i64: 2>, scalar_prefetch = 1 : i64, scratch_operands = 0 : i64, tpu.core_type = #tpu.core_type<tc>, window_params = [{transform_indices = @transform_0, window_bounds = array<i64: 4, 8, 32>}, {transform_indices = @transform_1, window_bounds = array<i64: 4, 8, 32>}, {pipeline_mode = #tpu.pipeline_mode<synchronous>, transform_indices = @transform_2, window_bounds = array<i64: 32, 128>}, {pipeline_mode = #tpu.pipeline_mode<synchronous>, transform_indices = @transform_3, window_bounds = array<i64: 32, 128>}, {pipeline_mode = #tpu.pipeline_mode<synchronous>, transform_indices = @transform_4, window_bounds = array<i64: 256, 128>}, {pipeline_mode = #tpu.pipeline_mode<synchronous>, transform_indices = @transform_5, window_bounds = array<i64: 1, 128>}, {pipeline_mode = #tpu.pipeline_mode<synchronous>, transform_indices = @transform_6, window_bounds = array<i64: 1, 128>}, {pipeline_mode = #tpu.pipeline_mode<synchronous>, transform_indices = @transform_7, window_bounds = array<i64: 1, 128>}, {transform_indices = @transform_8, window_bounds = array<i64: 4, 8, 128>}, {transform_indices = @transform_9, window_bounds = array<i64: 4, 8, 8>}]} {
    %c4_i32 = arith.constant 4 : i32
    %0 = arith.muli %arg0, %c4_i32 : i32
    %c0 = arith.constant 0 : index
    %c0_0 = arith.constant 0 : index
    %c0_1 = arith.constant 0 : index
    %1 = vector.load %arg2[%c0, %c0_0, %c0_1] : memref<4x8x32xbf16, #tpu.memory_space<vmem>>, vector<4x8x32xbf16>
    %2 = arith.extf %1 : vector<4x8x32xbf16> to vector<4x8x32xf32>
    %3 = vector.shape_cast %2 : vector<4x8x32xf32> to vector<32x32xf32>
    %4 = arith.truncf %3 : vector<32x32xf32> to vector<32x32xbf16>
    %c0_2 = arith.constant 0 : index
    %c0_3 = arith.constant 0 : index
    %5 = vector.load %arg4[%c0_2, %c0_3] : memref<32x128xbf16, #tpu.memory_space<vmem>>, vector<32x128xbf16>
    %cst = arith.constant dense<0.000000e+00> : vector<32x128xf32>
    %6 = tpu.matmul %4, %5, %cst {dimension_numbers = #tpu.dot_dimension_numbers<[1], [0], [0], [1], [0, 0, 1, 1], [], []>} : vector<32x32xbf16>, vector<32x128xbf16>, vector<32x128xf32> -> vector<32x128xf32>
    %c0_4 = arith.constant 0 : index
    %c0_5 = arith.constant 0 : index
    %7 = vector.load %arg7[%c0_4, %c0_5] : memref<1x128xf32, #tpu.memory_space<vmem>>, vector<1x128xf32>
    %8 = vector.broadcast %7 : vector<1x128xf32> to vector<32x128xf32>
    %9 = arith.addf %6, %8 : vector<32x128xf32>
    %10 = math.tanh %9 : vector<32x128xf32>
    %c0_6 = arith.constant 0 : index
    %c0_7 = arith.constant 0 : index
    %c0_8 = arith.constant 0 : index
    %11 = vector.load %arg3[%c0_6, %c0_7, %c0_8] : memref<4x8x32xbf16, #tpu.memory_space<vmem>>, vector<4x8x32xbf16>
    %12 = arith.extf %11 : vector<4x8x32xbf16> to vector<4x8x32xf32>
    %13 = vector.shape_cast %12 : vector<4x8x32xf32> to vector<32x32xf32>
    %14 = arith.truncf %13 : vector<32x32xf32> to vector<32x32xbf16>
    %c0_9 = arith.constant 0 : index
    %c0_10 = arith.constant 0 : index
    %15 = vector.load %arg5[%c0_9, %c0_10] : memref<32x128xbf16, #tpu.memory_space<vmem>>, vector<32x128xbf16>
    %cst_11 = arith.constant dense<0.000000e+00> : vector<32x128xf32>
    %16 = tpu.matmul %14, %15, %cst_11 {dimension_numbers = #tpu.dot_dimension_numbers<[1], [0], [0], [1], [0, 0, 1, 1], [], []>} : vector<32x32xbf16>, vector<32x128xbf16>, vector<32x128xf32> -> vector<32x128xf32>
    %c0_12 = arith.constant 0 : index
    %c0_13 = arith.constant 0 : index
    %17 = vector.load %arg8[%c0_12, %c0_13] : memref<1x128xf32, #tpu.memory_space<vmem>>, vector<1x128xf32>
    %18 = vector.broadcast %17 : vector<1x128xf32> to vector<32x128xf32>
    %19 = arith.addf %16, %18 : vector<32x128xf32>
    %20 = math.tanh %19 : vector<32x128xf32>
    %21 = tpu.iota {dimensions = array<i32: 1>} : vector<8x8xi32>
    %22 = vector.extract_strided_slice %10 {offsets = [0, 0], sizes = [8, 128], strides = [1, 1]} : vector<32x128xf32> to vector<8x128xf32>
    %23 = arith.truncf %22 : vector<8x128xf32> to vector<8x128xbf16>
    %cst_14 = arith.constant dense<0.000000e+00> : vector<128xf32>
    %24 = vector.multi_reduction <add>, %22, %cst_14 [0] : vector<8x128xf32> to vector<128xf32>
    %25 = vector.shape_cast %24 : vector<128xf32> to vector<1x128xf32>
    %cst_15 = arith.constant 8.000000e+00 : f32
    %26 = vector.broadcast %cst_15 : f32 to vector<1x128xf32>
    %27 = arith.divf %25, %26 : vector<1x128xf32>
    %28 = vector.extract_strided_slice %20 {offsets = [0, 0], sizes = [8, 128], strides = [1, 1]} : vector<32x128xf32> to vector<8x128xf32>
    %29 = vector.broadcast %27 : vector<1x128xf32> to vector<8x128xf32>
    %30 = arith.addf %28, %29 : vector<8x128xf32>
    %31 = arith.truncf %30 : vector<8x128xf32> to vector<8x128xbf16>
    %cst_16 = arith.constant dense<0.000000e+00> : vector<8x8xf32>
    %32 = tpu.matmul %31, %23, %cst_16 {dimension_numbers = #tpu.dot_dimension_numbers<[1], [1], [0], [0], [0, 0, 1, 0], [], []>} : vector<8x128xbf16>, vector<8x128xbf16>, vector<8x8xf32> -> vector<8x8xf32>
    %c0_i32 = arith.constant 0 : i32
    %33 = arith.addi %0, %c0_i32 : i32
    %34 = arith.index_cast %33 : i32 to index
    %35 = memref.load %arg1[%34] : memref<8xi32, #tpu.memory_space<smem>>
    %36 = vector.broadcast %35 : i32 to vector<8x8xi32>
    %37 = arith.cmpi slt, %21, %36 : vector<8x8xi32>
    %cst_17 = arith.constant -1.000000e+30 : f32
    %38 = vector.broadcast %cst_17 : f32 to vector<8x8xf32>
    %39 = arith.select %37, %32, %38 : vector<8x8xi1>, vector<8x8xf32>
    %cst_18 = arith.constant dense<0xFF800000> : vector<8xf32>
    %40 = vector.multi_reduction <maximumf>, %39, %cst_18 [1] : vector<8x8xf32> to vector<8xf32>
    %41 = vector.shape_cast %40 : vector<8xf32> to vector<8x1xf32>
    %42 = vector.broadcast %41 : vector<8x1xf32> to vector<8x8xf32>
    %43 = arith.subf %39, %42 : vector<8x8xf32>
    %44 = math.exp %43 : vector<8x8xf32>
    %cst_19 = arith.constant dense<0.000000e+00> : vector<8xf32>
    %45 = vector.multi_reduction <add>, %44, %cst_19 [1] : vector<8x8xf32> to vector<8xf32>
    %46 = vector.shape_cast %45 : vector<8xf32> to vector<8x1xf32>
    %47 = tpu.reciprocal %46 {approx = true} : vector<8x1xf32> -> vector<8x1xf32>
    %48 = vector.broadcast %47 : vector<8x1xf32> to vector<8x8xf32>
    %49 = arith.mulf %44, %48 : vector<8x8xf32>
    %c0_20 = arith.constant 0 : index
    %c0_21 = arith.constant 0 : index
    %c0_22 = arith.constant 0 : index
    %50 = vector.load %arg11[%c0_20, %c0_21, %c0_22] : memref<4x8x8xf32, #tpu.memory_space<vmem>>, vector<1x8x8xf32>
    %51 = vector.shape_cast %50 : vector<1x8x8xf32> to vector<8x8xf32>
    %52 = vector.shape_cast %49 : vector<8x8xf32> to vector<1x8x8xf32>
    tpu.vector_store %arg11[%c0_20, %c0_21, %c0_22], %52 {strides = array<i32>} : memref<4x8x8xf32, #tpu.memory_space<vmem>>, vector<1x8x8xf32>,
    %53 = arith.truncf %49 : vector<8x8xf32> to vector<8x8xbf16>
    %cst_23 = arith.constant dense<0.000000e+00> : vector<8x128xf32>
    %54 = tpu.matmul %53, %23, %cst_23 {dimension_numbers = #tpu.dot_dimension_numbers<[1], [0], [0], [1], [0, 0, 1, 1], [], []>} : vector<8x8xbf16>, vector<8x128xbf16>, vector<8x128xf32> -> vector<8x128xf32>
    %55 = vector.extract_strided_slice %10 {offsets = [8, 0], sizes = [8, 128], strides = [1, 1]} : vector<32x128xf32> to vector<8x128xf32>
    %56 = arith.truncf %55 : vector<8x128xf32> to vector<8x128xbf16>
    %cst_24 = arith.constant dense<0.000000e+00> : vector<128xf32>
    %57 = vector.multi_reduction <add>, %55, %cst_24 [0] : vector<8x128xf32> to vector<128xf32>
    %58 = vector.shape_cast %57 : vector<128xf32> to vector<1x128xf32>
    %cst_25 = arith.constant 8.000000e+00 : f32
    %59 = vector.broadcast %cst_25 : f32 to vector<1x128xf32>
    %60 = arith.divf %58, %59 : vector<1x128xf32>
    %61 = vector.extract_strided_slice %20 {offsets = [8, 0], sizes = [8, 128], strides = [1, 1]} : vector<32x128xf32> to vector<8x128xf32>
    %62 = vector.broadcast %60 : vector<1x128xf32> to vector<8x128xf32>
    %63 = arith.addf %61, %62 : vector<8x128xf32>
    %64 = arith.truncf %63 : vector<8x128xf32> to vector<8x128xbf16>
    %cst_26 = arith.constant dense<0.000000e+00> : vector<8x8xf32>
    %65 = tpu.matmul %64, %56, %cst_26 {dimension_numbers = #tpu.dot_dimension_numbers<[1], [1], [0], [0], [0, 0, 1, 0], [], []>} : vector<8x128xbf16>, vector<8x128xbf16>, vector<8x8xf32> -> vector<8x8xf32>
    %c1_i32 = arith.constant 1 : i32
    %66 = arith.addi %0, %c1_i32 : i32
    %67 = arith.index_cast %66 : i32 to index
    %68 = memref.load %arg1[%67] : memref<8xi32, #tpu.memory_space<smem>>
    %69 = vector.broadcast %68 : i32 to vector<8x8xi32>
    %70 = arith.cmpi slt, %21, %69 : vector<8x8xi32>
    %cst_27 = arith.constant -1.000000e+30 : f32
    %71 = vector.broadcast %cst_27 : f32 to vector<8x8xf32>
    %72 = arith.select %70, %65, %71 : vector<8x8xi1>, vector<8x8xf32>
    %cst_28 = arith.constant dense<0xFF800000> : vector<8xf32>
    %73 = vector.multi_reduction <maximumf>, %72, %cst_28 [1] : vector<8x8xf32> to vector<8xf32>
    %74 = vector.shape_cast %73 : vector<8xf32> to vector<8x1xf32>
    %75 = vector.broadcast %74 : vector<8x1xf32> to vector<8x8xf32>
    %76 = arith.subf %72, %75 : vector<8x8xf32>
    %77 = math.exp %76 : vector<8x8xf32>
    %cst_29 = arith.constant dense<0.000000e+00> : vector<8xf32>
    %78 = vector.multi_reduction <add>, %77, %cst_29 [1] : vector<8x8xf32> to vector<8xf32>
    %79 = vector.shape_cast %78 : vector<8xf32> to vector<8x1xf32>
    %80 = tpu.reciprocal %79 {approx = true} : vector<8x1xf32> -> vector<8x1xf32>
    %81 = vector.broadcast %80 : vector<8x1xf32> to vector<8x8xf32>
    %82 = arith.mulf %77, %81 : vector<8x8xf32>
    %c1 = arith.constant 1 : index
    %c0_30 = arith.constant 0 : index
    %c0_31 = arith.constant 0 : index
    %83 = vector.load %arg11[%c1, %c0_30, %c0_31] : memref<4x8x8xf32, #tpu.memory_space<vmem>>, vector<1x8x8xf32>
    %84 = vector.shape_cast %83 : vector<1x8x8xf32> to vector<8x8xf32>
    %85 = vector.shape_cast %82 : vector<8x8xf32> to vector<1x8x8xf32>
    tpu.vector_store %arg11[%c1, %c0_30, %c0_31], %85 {strides = array<i32>} : memref<4x8x8xf32, #tpu.memory_space<vmem>>, vector<1x8x8xf32>,
    %86 = arith.truncf %82 : vector<8x8xf32> to vector<8x8xbf16>
    %cst_32 = arith.constant dense<0.000000e+00> : vector<8x128xf32>
    %87 = tpu.matmul %86, %56, %cst_32 {dimension_numbers = #tpu.dot_dimension_numbers<[1], [0], [0], [1], [0, 0, 1, 1], [], []>} : vector<8x8xbf16>, vector<8x128xbf16>, vector<8x128xf32> -> vector<8x128xf32>
    %88 = vector.extract_strided_slice %10 {offsets = [16, 0], sizes = [8, 128], strides = [1, 1]} : vector<32x128xf32> to vector<8x128xf32>
    %89 = arith.truncf %88 : vector<8x128xf32> to vector<8x128xbf16>
    %cst_33 = arith.constant dense<0.000000e+00> : vector<128xf32>
    %90 = vector.multi_reduction <add>, %88, %cst_33 [0] : vector<8x128xf32> to vector<128xf32>
    %91 = vector.shape_cast %90 : vector<128xf32> to vector<1x128xf32>
    %cst_34 = arith.constant 8.000000e+00 : f32
    %92 = vector.broadcast %cst_34 : f32 to vector<1x128xf32>
    %93 = arith.divf %91, %92 : vector<1x128xf32>
    %94 = vector.extract_strided_slice %20 {offsets = [16, 0], sizes = [8, 128], strides = [1, 1]} : vector<32x128xf32> to vector<8x128xf32>
    %95 = vector.broadcast %93 : vector<1x128xf32> to vector<8x128xf32>
    %96 = arith.addf %94, %95 : vector<8x128xf32>
    %97 = arith.truncf %96 : vector<8x128xf32> to vector<8x128xbf16>
    %cst_35 = arith.constant dense<0.000000e+00> : vector<8x8xf32>
    %98 = tpu.matmul %97, %89, %cst_35 {dimension_numbers = #tpu.dot_dimension_numbers<[1], [1], [0], [0], [0, 0, 1, 0], [], []>} : vector<8x128xbf16>, vector<8x128xbf16>, vector<8x8xf32> -> vector<8x8xf32>
    %c2_i32 = arith.constant 2 : i32
    %99 = arith.addi %0, %c2_i32 : i32
    %100 = arith.index_cast %99 : i32 to index
    %101 = memref.load %arg1[%100] : memref<8xi32, #tpu.memory_space<smem>>
    %102 = vector.broadcast %101 : i32 to vector<8x8xi32>
    %103 = arith.cmpi slt, %21, %102 : vector<8x8xi32>
    %cst_36 = arith.constant -1.000000e+30 : f32
    %104 = vector.broadcast %cst_36 : f32 to vector<8x8xf32>
    %105 = arith.select %103, %98, %104 : vector<8x8xi1>, vector<8x8xf32>
    %cst_37 = arith.constant dense<0xFF800000> : vector<8xf32>
    %106 = vector.multi_reduction <maximumf>, %105, %cst_37 [1] : vector<8x8xf32> to vector<8xf32>
    %107 = vector.shape_cast %106 : vector<8xf32> to vector<8x1xf32>
    %108 = vector.broadcast %107 : vector<8x1xf32> to vector<8x8xf32>
    %109 = arith.subf %105, %108 : vector<8x8xf32>
    %110 = math.exp %109 : vector<8x8xf32>
    %cst_38 = arith.constant dense<0.000000e+00> : vector<8xf32>
    %111 = vector.multi_reduction <add>, %110, %cst_38 [1] : vector<8x8xf32> to vector<8xf32>
    %112 = vector.shape_cast %111 : vector<8xf32> to vector<8x1xf32>
    %113 = tpu.reciprocal %112 {approx = true} : vector<8x1xf32> -> vector<8x1xf32>
    %114 = vector.broadcast %113 : vector<8x1xf32> to vector<8x8xf32>
    %115 = arith.mulf %110, %114 : vector<8x8xf32>
    %c2 = arith.constant 2 : index
    %c0_39 = arith.constant 0 : index
    %c0_40 = arith.constant 0 : index
    %116 = vector.load %arg11[%c2, %c0_39, %c0_40] : memref<4x8x8xf32, #tpu.memory_space<vmem>>, vector<1x8x8xf32>
    %117 = vector.shape_cast %116 : vector<1x8x8xf32> to vector<8x8xf32>
    %118 = vector.shape_cast %115 : vector<8x8xf32> to vector<1x8x8xf32>
    tpu.vector_store %arg11[%c2, %c0_39, %c0_40], %118 {strides = array<i32>} : memref<4x8x8xf32, #tpu.memory_space<vmem>>, vector<1x8x8xf32>,
    %119 = arith.truncf %115 : vector<8x8xf32> to vector<8x8xbf16>
    %cst_41 = arith.constant dense<0.000000e+00> : vector<8x128xf32>
    %120 = tpu.matmul %119, %89, %cst_41 {dimension_numbers = #tpu.dot_dimension_numbers<[1], [0], [0], [1], [0, 0, 1, 1], [], []>} : vector<8x8xbf16>, vector<8x128xbf16>, vector<8x128xf32> -> vector<8x128xf32>
    %121 = vector.extract_strided_slice %10 {offsets = [24, 0], sizes = [8, 128], strides = [1, 1]} : vector<32x128xf32> to vector<8x128xf32>
    %122 = arith.truncf %121 : vector<8x128xf32> to vector<8x128xbf16>
    %cst_42 = arith.constant dense<0.000000e+00> : vector<128xf32>
    %123 = vector.multi_reduction <add>, %121, %cst_42 [0] : vector<8x128xf32> to vector<128xf32>
    %124 = vector.shape_cast %123 : vector<128xf32> to vector<1x128xf32>
    %cst_43 = arith.constant 8.000000e+00 : f32
    %125 = vector.broadcast %cst_43 : f32 to vector<1x128xf32>
    %126 = arith.divf %124, %125 : vector<1x128xf32>
    %127 = vector.extract_strided_slice %20 {offsets = [24, 0], sizes = [8, 128], strides = [1, 1]} : vector<32x128xf32> to vector<8x128xf32>
    %128 = vector.broadcast %126 : vector<1x128xf32> to vector<8x128xf32>
    %129 = arith.addf %127, %128 : vector<8x128xf32>
    %130 = arith.truncf %129 : vector<8x128xf32> to vector<8x128xbf16>
    %cst_44 = arith.constant dense<0.000000e+00> : vector<8x8xf32>
    %131 = tpu.matmul %130, %122, %cst_44 {dimension_numbers = #tpu.dot_dimension_numbers<[1], [1], [0], [0], [0, 0, 1, 0], [], []>} : vector<8x128xbf16>, vector<8x128xbf16>, vector<8x8xf32> -> vector<8x8xf32>
    %c3_i32 = arith.constant 3 : i32
    %132 = arith.addi %0, %c3_i32 : i32
    %133 = arith.index_cast %132 : i32 to index
    %134 = memref.load %arg1[%133] : memref<8xi32, #tpu.memory_space<smem>>
    %135 = vector.broadcast %134 : i32 to vector<8x8xi32>
    %136 = arith.cmpi slt, %21, %135 : vector<8x8xi32>
    %cst_45 = arith.constant -1.000000e+30 : f32
    %137 = vector.broadcast %cst_45 : f32 to vector<8x8xf32>
    %138 = arith.select %136, %131, %137 : vector<8x8xi1>, vector<8x8xf32>
    %cst_46 = arith.constant dense<0xFF800000> : vector<8xf32>
    %139 = vector.multi_reduction <maximumf>, %138, %cst_46 [1] : vector<8x8xf32> to vector<8xf32>
    %140 = vector.shape_cast %139 : vector<8xf32> to vector<8x1xf32>
    %141 = vector.broadcast %140 : vector<8x1xf32> to vector<8x8xf32>
    %142 = arith.subf %138, %141 : vector<8x8xf32>
    %143 = math.exp %142 : vector<8x8xf32>
    %cst_47 = arith.constant dense<0.000000e+00> : vector<8xf32>
    %144 = vector.multi_reduction <add>, %143, %cst_47 [1] : vector<8x8xf32> to vector<8xf32>
    %145 = vector.shape_cast %144 : vector<8xf32> to vector<8x1xf32>
    %146 = tpu.reciprocal %145 {approx = true} : vector<8x1xf32> -> vector<8x1xf32>
    %147 = vector.broadcast %146 : vector<8x1xf32> to vector<8x8xf32>
    %148 = arith.mulf %143, %147 : vector<8x8xf32>
    %c3 = arith.constant 3 : index
    %c0_48 = arith.constant 0 : index
    %c0_49 = arith.constant 0 : index
    %149 = vector.load %arg11[%c3, %c0_48, %c0_49] : memref<4x8x8xf32, #tpu.memory_space<vmem>>, vector<1x8x8xf32>
    %150 = vector.shape_cast %149 : vector<1x8x8xf32> to vector<8x8xf32>
    %151 = vector.shape_cast %148 : vector<8x8xf32> to vector<1x8x8xf32>
    tpu.vector_store %arg11[%c3, %c0_48, %c0_49], %151 {strides = array<i32>} : memref<4x8x8xf32, #tpu.memory_space<vmem>>, vector<1x8x8xf32>,
    %152 = arith.truncf %148 : vector<8x8xf32> to vector<8x8xbf16>
    %cst_50 = arith.constant dense<0.000000e+00> : vector<8x128xf32>
    %153 = tpu.matmul %152, %122, %cst_50 {dimension_numbers = #tpu.dot_dimension_numbers<[1], [0], [0], [1], [0, 0, 1, 1], [], []>} : vector<8x8xbf16>, vector<8x128xbf16>, vector<8x128xf32> -> vector<8x128xf32>
    %154 = tpu.concatenate %54, %87, %120, %153 in 0 : vector<8x128xf32>, vector<8x128xf32>, vector<8x128xf32>, vector<8x128xf32> -> vector<32x128xf32>
    %155 = tpu.concatenate %30, %63, %96, %129 in 0 : vector<8x128xf32>, vector<8x128xf32>, vector<8x128xf32>, vector<8x128xf32> -> vector<32x128xf32>
    %156 = tpu.concatenate %154, %155 in 1 : vector<32x128xf32>, vector<32x128xf32> -> vector<32x256xf32>
    %157 = arith.truncf %156 : vector<32x256xf32> to vector<32x256xbf16>
    %c0_51 = arith.constant 0 : index
    %c0_52 = arith.constant 0 : index
    %158 = vector.load %arg6[%c0_51, %c0_52] : memref<256x128xbf16, #tpu.memory_space<vmem>>, vector<256x128xbf16>
    %cst_53 = arith.constant dense<0.000000e+00> : vector<32x128xf32>
    %159 = tpu.matmul %157, %158, %cst_53 {dimension_numbers = #tpu.dot_dimension_numbers<[1], [0], [0], [1], [0, 0, 1, 1], [], []>} : vector<32x256xbf16>, vector<256x128xbf16>, vector<32x128xf32> -> vector<32x128xf32>
    %c0_54 = arith.constant 0 : index
    %c0_55 = arith.constant 0 : index
    %160 = vector.load %arg9[%c0_54, %c0_55] : memref<1x128xf32, #tpu.memory_space<vmem>>, vector<1x128xf32>
    %161 = vector.broadcast %160 : vector<1x128xf32> to vector<32x128xf32>
    %162 = arith.addf %159, %161 : vector<32x128xf32>
    %163 = math.tanh %162 : vector<32x128xf32>
    %164 = vector.extract_strided_slice %163 {offsets = [0, 0], sizes = [8, 128], strides = [1, 1]} : vector<32x128xf32> to vector<8x128xf32>
    %c0_56 = arith.constant 0 : index
    %c0_57 = arith.constant 0 : index
    %c0_58 = arith.constant 0 : index
    %165 = vector.load %arg10[%c0_56, %c0_57, %c0_58] : memref<4x8x128xf32, #tpu.memory_space<vmem>>, vector<1x8x128xf32>
    %166 = vector.shape_cast %165 : vector<1x8x128xf32> to vector<8x128xf32>
    %167 = vector.shape_cast %164 : vector<8x128xf32> to vector<1x8x128xf32>
    tpu.vector_store %arg10[%c0_56, %c0_57, %c0_58], %167 {strides = array<i32>} : memref<4x8x128xf32, #tpu.memory_space<vmem>>, vector<1x8x128xf32>,
    %168 = vector.extract_strided_slice %163 {offsets = [8, 0], sizes = [8, 128], strides = [1, 1]} : vector<32x128xf32> to vector<8x128xf32>
    %c1_59 = arith.constant 1 : index
    %c0_60 = arith.constant 0 : index
    %c0_61 = arith.constant 0 : index
    %169 = vector.load %arg10[%c1_59, %c0_60, %c0_61] : memref<4x8x128xf32, #tpu.memory_space<vmem>>, vector<1x8x128xf32>
    %170 = vector.shape_cast %169 : vector<1x8x128xf32> to vector<8x128xf32>
    %171 = vector.shape_cast %168 : vector<8x128xf32> to vector<1x8x128xf32>
    tpu.vector_store %arg10[%c1_59, %c0_60, %c0_61], %171 {strides = array<i32>} : memref<4x8x128xf32, #tpu.memory_space<vmem>>, vector<1x8x128xf32>,
    %172 = vector.extract_strided_slice %163 {offsets = [16, 0], sizes = [8, 128], strides = [1, 1]} : vector<32x128xf32> to vector<8x128xf32>
    %c2_62 = arith.constant 2 : index
    %c0_63 = arith.constant 0 : index
    %c0_64 = arith.constant 0 : index
    %173 = vector.load %arg10[%c2_62, %c0_63, %c0_64] : memref<4x8x128xf32, #tpu.memory_space<vmem>>, vector<1x8x128xf32>
    %174 = vector.shape_cast %173 : vector<1x8x128xf32> to vector<8x128xf32>
    %175 = vector.shape_cast %172 : vector<8x128xf32> to vector<1x8x128xf32>
    tpu.vector_store %arg10[%c2_62, %c0_63, %c0_64], %175 {strides = array<i32>} : memref<4x8x128xf32, #tpu.memory_space<vmem>>, vector<1x8x128xf32>,
    %176 = vector.extract_strided_slice %163 {offsets = [24, 0], sizes = [8, 128], strides = [1, 1]} : vector<32x128xf32> to vector<8x128xf32>
    %c3_65 = arith.constant 3 : index
    %c0_66 = arith.constant 0 : index
    %c0_67 = arith.constant 0 : index
    %177 = vector.load %arg10[%c3_65, %c0_66, %c0_67] : memref<4x8x128xf32, #tpu.memory_space<vmem>>, vector<1x8x128xf32>
    %178 = vector.shape_cast %177 : vector<1x8x128xf32> to vector<8x128xf32>
    %179 = vector.shape_cast %176 : vector<8x128xf32> to vector<1x8x128xf32>
    tpu.vector_store %arg10[%c3_65, %c0_66, %c0_67], %179 {strides = array<i32>} : memref<4x8x128xf32, #tpu.memory_space<vmem>>, vector<1x8x128xf32>,
    return
  }
  func.func @transform_0(%arg0: i32, %arg1: memref<8xi32, #tpu.memory_space<smem>>) -> (i32, i32, i32) {
    %c0_i32 = arith.constant 0 : i32
    %c0_i32_0 = arith.constant 0 : i32
    %c0_i32_1 = arith.constant 0 : i32
    return %arg0, %c0_i32, %c0_i32_0 : i32, i32, i32
  }
  func.func @transform_1(%arg0: i32, %arg1: memref<8xi32, #tpu.memory_space<smem>>) -> (i32, i32, i32) {
    %c0_i32 = arith.constant 0 : i32
    %c0_i32_0 = arith.constant 0 : i32
    %c0_i32_1 = arith.constant 0 : i32
    return %arg0, %c0_i32, %c0_i32_0 : i32, i32, i32
  }
  func.func @transform_2(%arg0: i32, %arg1: memref<8xi32, #tpu.memory_space<smem>>) -> (i32, i32) {
    %c0_i32 = arith.constant 0 : i32
    %c0_i32_0 = arith.constant 0 : i32
    %c0_i32_1 = arith.constant 0 : i32
    return %c0_i32, %c0_i32_0 : i32, i32
  }
  func.func @transform_3(%arg0: i32, %arg1: memref<8xi32, #tpu.memory_space<smem>>) -> (i32, i32) {
    %c0_i32 = arith.constant 0 : i32
    %c0_i32_0 = arith.constant 0 : i32
    %c0_i32_1 = arith.constant 0 : i32
    return %c0_i32, %c0_i32_0 : i32, i32
  }
  func.func @transform_4(%arg0: i32, %arg1: memref<8xi32, #tpu.memory_space<smem>>) -> (i32, i32) {
    %c0_i32 = arith.constant 0 : i32
    %c0_i32_0 = arith.constant 0 : i32
    %c0_i32_1 = arith.constant 0 : i32
    return %c0_i32, %c0_i32_0 : i32, i32
  }
  func.func @transform_5(%arg0: i32, %arg1: memref<8xi32, #tpu.memory_space<smem>>) -> (i32, i32) {
    %c0_i32 = arith.constant 0 : i32
    %c0_i32_0 = arith.constant 0 : i32
    %c0_i32_1 = arith.constant 0 : i32
    return %c0_i32, %c0_i32_0 : i32, i32
  }
  func.func @transform_6(%arg0: i32, %arg1: memref<8xi32, #tpu.memory_space<smem>>) -> (i32, i32) {
    %c0_i32 = arith.constant 0 : i32
    %c0_i32_0 = arith.constant 0 : i32
    %c0_i32_1 = arith.constant 0 : i32
    return %c0_i32, %c0_i32_0 : i32, i32
  }
  func.func @transform_7(%arg0: i32, %arg1: memref<8xi32, #tpu.memory_space<smem>>) -> (i32, i32) {
    %c0_i32 = arith.constant 0 : i32
    %c0_i32_0 = arith.constant 0 : i32
    %c0_i32_1 = arith.constant 0 : i32
    return %c0_i32, %c0_i32_0 : i32, i32
  }
  func.func @transform_8(%arg0: i32, %arg1: memref<8xi32, #tpu.memory_space<smem>>) -> (i32, i32, i32) {
    %c0_i32 = arith.constant 0 : i32
    %c0_i32_0 = arith.constant 0 : i32
    %c0_i32_1 = arith.constant 0 : i32
    return %arg0, %c0_i32, %c0_i32_0 : i32, i32, i32
  }
  func.func @transform_9(%arg0: i32, %arg1: memref<8xi32, #tpu.memory_space<smem>>) -> (i32, i32, i32) {
    %c0_i32 = arith.constant 0 : i32
    %c0_i32_0 = arith.constant 0 : i32
    %c0_i32_1 = arith.constant 0 : i32
    return %arg0, %c0_i32, %c0_i32_0 : i32, i32, i32
  }
}

module attributes {stable_mosaic.version = 11 : i64} {
  func.func @_nmt_fused_kernel(%arg0: i32, %arg1: memref<8xi32, #tpu.memory_space<smem>>, %arg2: memref<4x8x32xbf16, #tpu.memory_space<vmem>>, %arg3: memref<4x8x32xbf16, #tpu.memory_space<vmem>>, %arg4: memref<32x128xbf16, #tpu.memory_space<vmem>>, %arg5: memref<32x128xbf16, #tpu.memory_space<vmem>>, %arg6: memref<256x128xbf16, #tpu.memory_space<vmem>>, %arg7: memref<1x128xf32, #tpu.memory_space<vmem>>, %arg8: memref<1x128xf32, #tpu.memory_space<vmem>>, %arg9: memref<1x128xf32, #tpu.memory_space<vmem>>, %arg10: memref<4x8x128xf32, #tpu.memory_space<vmem>>, %arg11: memref<4x8x8xf32, #tpu.memory_space<vmem>>) attributes {dimension_semantics = [#tpu.dimension_semantics<parallel>], iteration_bounds = array<i64: 2>, scalar_prefetch = 1 : i64, scratch_operands = 0 : i64, tpu.core_type = #tpu.core_type<tc>, window_params = [{transform_indices = @transform_0, window_bounds = array<i64: 4, 8, 32>}, {transform_indices = @transform_1, window_bounds = array<i64: 4, 8, 32>}, {pipeline_mode = #tpu.pipeline_mode<synchronous>, transform_indices = @transform_2, window_bounds = array<i64: 32, 128>}, {pipeline_mode = #tpu.pipeline_mode<synchronous>, transform_indices = @transform_3, window_bounds = array<i64: 32, 128>}, {pipeline_mode = #tpu.pipeline_mode<synchronous>, transform_indices = @transform_4, window_bounds = array<i64: 256, 128>}, {pipeline_mode = #tpu.pipeline_mode<synchronous>, transform_indices = @transform_5, window_bounds = array<i64: 1, 128>}, {pipeline_mode = #tpu.pipeline_mode<synchronous>, transform_indices = @transform_6, window_bounds = array<i64: 1, 128>}, {pipeline_mode = #tpu.pipeline_mode<synchronous>, transform_indices = @transform_7, window_bounds = array<i64: 1, 128>}, {transform_indices = @transform_8, window_bounds = array<i64: 4, 8, 128>}, {transform_indices = @transform_9, window_bounds = array<i64: 4, 8, 8>}]} {
    %c4_i32 = arith.constant 4 : i32
    %0 = arith.muli %arg0, %c4_i32 : i32
    %c0 = arith.constant 0 : index
    %c0_0 = arith.constant 0 : index
    %c0_1 = arith.constant 0 : index
    %1 = vector.load %arg2[%c0, %c0_0, %c0_1] : memref<4x8x32xbf16, #tpu.memory_space<vmem>>, vector<4x8x32xbf16>
    %2 = arith.extf %1 : vector<4x8x32xbf16> to vector<4x8x32xf32>
    %3 = vector.shape_cast %2 : vector<4x8x32xf32> to vector<32x32xf32>
    %4 = arith.truncf %3 : vector<32x32xf32> to vector<32x32xbf16>
    %c0_2 = arith.constant 0 : index
    %c0_3 = arith.constant 0 : index
    %5 = vector.load %arg4[%c0_2, %c0_3] : memref<32x128xbf16, #tpu.memory_space<vmem>>, vector<32x128xbf16>
    %cst = arith.constant dense<0.000000e+00> : vector<32x128xf32>
    %6 = tpu.matmul %4, %5, %cst {dimension_numbers = #tpu.dot_dimension_numbers<[1], [0], [0], [1], [0, 0, 1, 1], [], []>} : vector<32x32xbf16>, vector<32x128xbf16>, vector<32x128xf32> -> vector<32x128xf32>
    %c0_4 = arith.constant 0 : index
    %c0_5 = arith.constant 0 : index
    %7 = vector.load %arg7[%c0_4, %c0_5] : memref<1x128xf32, #tpu.memory_space<vmem>>, vector<1x128xf32>
    %8 = vector.broadcast %7 : vector<1x128xf32> to vector<32x128xf32>
    %9 = arith.addf %6, %8 : vector<32x128xf32>
    %10 = math.tanh %9 : vector<32x128xf32>
    %c0_6 = arith.constant 0 : index
    %c0_7 = arith.constant 0 : index
    %c0_8 = arith.constant 0 : index
    %11 = vector.load %arg3[%c0_6, %c0_7, %c0_8] : memref<4x8x32xbf16, #tpu.memory_space<vmem>>, vector<4x8x32xbf16>
    %12 = arith.extf %11 : vector<4x8x32xbf16> to vector<4x8x32xf32>
    %13 = vector.shape_cast %12 : vector<4x8x32xf32> to vector<32x32xf32>
    %14 = arith.truncf %13 : vector<32x32xf32> to vector<32x32xbf16>
    %c0_9 = arith.constant 0 : index
    %c0_10 = arith.constant 0 : index
    %15 = vector.load %arg5[%c0_9, %c0_10] : memref<32x128xbf16, #tpu.memory_space<vmem>>, vector<32x128xbf16>
    %cst_11 = arith.constant dense<0.000000e+00> : vector<32x128xf32>
    %16 = tpu.matmul %14, %15, %cst_11 {dimension_numbers = #tpu.dot_dimension_numbers<[1], [0], [0], [1], [0, 0, 1, 1], [], []>} : vector<32x32xbf16>, vector<32x128xbf16>, vector<32x128xf32> -> vector<32x128xf32>
    %c0_12 = arith.constant 0 : index
    %c0_13 = arith.constant 0 : index
    %17 = vector.load %arg8[%c0_12, %c0_13] : memref<1x128xf32, #tpu.memory_space<vmem>>, vector<1x128xf32>
    %18 = vector.broadcast %17 : vector<1x128xf32> to vector<32x128xf32>
    %19 = arith.addf %16, %18 : vector<32x128xf32>
    %20 = math.tanh %19 : vector<32x128xf32>
    %21 = tpu.iota {dimensions = array<i32: 1>} : vector<8x8xi32>
    %22 = vector.extract_strided_slice %10 {offsets = [0, 0], sizes = [8, 128], strides = [1, 1]} : vector<32x128xf32> to vector<8x128xf32>
    %23 = arith.truncf %22 : vector<8x128xf32> to vector<8x128xbf16>
    %cst_14 = arith.constant dense<0.000000e+00> : vector<128xf32>
    %24 = vector.multi_reduction <add>, %22, %cst_14 [0] : vector<8x128xf32> to vector<128xf32>
    %25 = vector.shape_cast %24 : vector<128xf32> to vector<1x128xf32>
    %cst_15 = arith.constant 8.000000e+00 : f32
    %26 = vector.broadcast %cst_15 : f32 to vector<1x128xf32>
    %27 = arith.divf %25, %26 : vector<1x128xf32>
    %28 = vector.extract_strided_slice %20 {offsets = [0, 0], sizes = [8, 128], strides = [1, 1]} : vector<32x128xf32> to vector<8x128xf32>
    %29 = vector.broadcast %27 : vector<1x128xf32> to vector<8x128xf32>
    %30 = arith.addf %28, %29 : vector<8x128xf32>
    %31 = arith.truncf %30 : vector<8x128xf32> to vector<8x128xbf16>
    %cst_16 = arith.constant dense<0.000000e+00> : vector<8x8xf32>
    %32 = tpu.matmul %31, %23, %cst_16 {dimension_numbers = #tpu.dot_dimension_numbers<[1], [1], [0], [0], [0, 0, 1, 0], [], []>} : vector<8x128xbf16>, vector<8x128xbf16>, vector<8x8xf32> -> vector<8x8xf32>
    %c0_i32 = arith.constant 0 : i32
    %33 = arith.addi %0, %c0_i32 : i32
    %34 = arith.index_cast %33 : i32 to index
    %35 = memref.load %arg1[%34] : memref<8xi32, #tpu.memory_space<smem>>
    %36 = vector.broadcast %35 : i32 to vector<8x8xi32>
    %37 = arith.cmpi slt, %21, %36 : vector<8x8xi32>
    %cst_17 = arith.constant -1.000000e+30 : f32
    %38 = vector.broadcast %cst_17 : f32 to vector<8x8xf32>
    %39 = arith.select %37, %32, %38 : vector<8x8xi1>, vector<8x8xf32>
    %cst_18 = arith.constant dense<0xFF800000> : vector<8xf32>
    %40 = vector.multi_reduction <maximumf>, %39, %cst_18 [1] : vector<8x8xf32> to vector<8xf32>
    %41 = vector.shape_cast %40 : vector<8xf32> to vector<8x1xf32>
    %42 = vector.broadcast %41 : vector<8x1xf32> to vector<8x8xf32>
    %43 = arith.subf %39, %42 : vector<8x8xf32>
    %44 = math.exp %43 : vector<8x8xf32>
    %cst_19 = arith.constant dense<0.000000e+00> : vector<8xf32>
    %45 = vector.multi_reduction <add>, %44, %cst_19 [1] : vector<8x8xf32> to vector<8xf32>
    %46 = vector.shape_cast %45 : vector<8xf32> to vector<8x1xf32>
    %47 = tpu.reciprocal %46 {approx = true} : vector<8x1xf32> -> vector<8x1xf32>
    %48 = vector.broadcast %47 : vector<8x1xf32> to vector<8x8xf32>
    %49 = arith.mulf %44, %48 : vector<8x8xf32>
    %c0_20 = arith.constant 0 : index
    %c0_21 = arith.constant 0 : index
    %c0_22 = arith.constant 0 : index
    %50 = vector.load %arg11[%c0_20, %c0_21, %c0_22] : memref<4x8x8xf32, #tpu.memory_space<vmem>>, vector<1x8x8xf32>
    %51 = vector.shape_cast %50 : vector<1x8x8xf32> to vector<8x8xf32>
    %52 = vector.shape_cast %49 : vector<8x8xf32> to vector<1x8x8xf32>
    tpu.vector_store %arg11[%c0_20, %c0_21, %c0_22], %52 {strides = array<i32>} : memref<4x8x8xf32, #tpu.memory_space<vmem>>, vector<1x8x8xf32>,
    %53 = arith.truncf %49 : vector<8x8xf32> to vector<8x8xbf16>
    %cst_23 = arith.constant dense<0.000000e+00> : vector<8x128xf32>
    %54 = tpu.matmul %53, %23, %cst_23 {dimension_numbers = #tpu.dot_dimension_numbers<[1], [0], [0], [1], [0, 0, 1, 1], [], []>} : vector<8x8xbf16>, vector<8x128xbf16>, vector<8x128xf32> -> vector<8x128xf32>
    %55 = vector.extract_strided_slice %10 {offsets = [8, 0], sizes = [8, 128], strides = [1, 1]} : vector<32x128xf32> to vector<8x128xf32>
    %56 = arith.truncf %55 : vector<8x128xf32> to vector<8x128xbf16>
    %cst_24 = arith.constant dense<0.000000e+00> : vector<128xf32>
    %57 = vector.multi_reduction <add>, %55, %cst_24 [0] : vector<8x128xf32> to vector<128xf32>
    %58 = vector.shape_cast %57 : vector<128xf32> to vector<1x128xf32>
    %cst_25 = arith.constant 8.000000e+00 : f32
    %59 = vector.broadcast %cst_25 : f32 to vector<1x128xf32>
    %60 = arith.divf %58, %59 : vector<1x128xf32>
    %61 = vector.extract_strided_slice %20 {offsets = [8, 0], sizes = [8, 128], strides = [1, 1]} : vector<32x128xf32> to vector<8x128xf32>
    %62 = vector.broadcast %60 : vector<1x128xf32> to vector<8x128xf32>
    %63 = arith.addf %61, %62 : vector<8x128xf32>
    %64 = arith.truncf %63 : vector<8x128xf32> to vector<8x128xbf16>
    %cst_26 = arith.constant dense<0.000000e+00> : vector<8x8xf32>
    %65 = tpu.matmul %64, %56, %cst_26 {dimension_numbers = #tpu.dot_dimension_numbers<[1], [1], [0], [0], [0, 0, 1, 0], [], []>} : vector<8x128xbf16>, vector<8x128xbf16>, vector<8x8xf32> -> vector<8x8xf32>
    %c1_i32 = arith.constant 1 : i32
    %66 = arith.addi %0, %c1_i32 : i32
    %67 = arith.index_cast %66 : i32 to index
    %68 = memref.load %arg1[%67] : memref<8xi32, #tpu.memory_space<smem>>
    %69 = vector.broadcast %68 : i32 to vector<8x8xi32>
    %70 = arith.cmpi slt, %21, %69 : vector<8x8xi32>
    %cst_27 = arith.constant -1.000000e+30 : f32
    %71 = vector.broadcast %cst_27 : f32 to vector<8x8xf32>
    %72 = arith.select %70, %65, %71 : vector<8x8xi1>, vector<8x8xf32>
    %cst_28 = arith.constant dense<0xFF800000> : vector<8xf32>
    %73 = vector.multi_reduction <maximumf>, %72, %cst_28 [1] : vector<8x8xf32> to vector<8xf32>
    %74 = vector.shape_cast %73 : vector<8xf32> to vector<8x1xf32>
    %75 = vector.broadcast %74 : vector<8x1xf32> to vector<8x8xf32>
    %76 = arith.subf %72, %75 : vector<8x8xf32>
    %77 = math.exp %76 : vector<8x8xf32>
    %cst_29 = arith.constant dense<0.000000e+00> : vector<8xf32>
    %78 = vector.multi_reduction <add>, %77, %cst_29 [1] : vector<8x8xf32> to vector<8xf32>
    %79 = vector.shape_cast %78 : vector<8xf32> to vector<8x1xf32>
    %80 = tpu.reciprocal %79 {approx = true} : vector<8x1xf32> -> vector<8x1xf32>
    %81 = vector.broadcast %80 : vector<8x1xf32> to vector<8x8xf32>
    %82 = arith.mulf %77, %81 : vector<8x8xf32>
    %c1 = arith.constant 1 : index
    %c0_30 = arith.constant 0 : index
    %c0_31 = arith.constant 0 : index
    %83 = vector.load %arg11[%c1, %c0_30, %c0_31] : memref<4x8x8xf32, #tpu.memory_space<vmem>>, vector<1x8x8xf32>
    %84 = vector.shape_cast %83 : vector<1x8x8xf32> to vector<8x8xf32>
    %85 = vector.shape_cast %82 : vector<8x8xf32> to vector<1x8x8xf32>
    tpu.vector_store %arg11[%c1, %c0_30, %c0_31], %85 {strides = array<i32>} : memref<4x8x8xf32, #tpu.memory_space<vmem>>, vector<1x8x8xf32>,
    %86 = arith.truncf %82 : vector<8x8xf32> to vector<8x8xbf16>
    %cst_32 = arith.constant dense<0.000000e+00> : vector<8x128xf32>
    %87 = tpu.matmul %86, %56, %cst_32 {dimension_numbers = #tpu.dot_dimension_numbers<[1], [0], [0], [1], [0, 0, 1, 1], [], []>} : vector<8x8xbf16>, vector<8x128xbf16>, vector<8x128xf32> -> vector<8x128xf32>
    %88 = vector.extract_strided_slice %10 {offsets = [16, 0], sizes = [8, 128], strides = [1, 1]} : vector<32x128xf32> to vector<8x128xf32>
    %89 = arith.truncf %88 : vector<8x128xf32> to vector<8x128xbf16>
    %cst_33 = arith.constant dense<0.000000e+00> : vector<128xf32>
    %90 = vector.multi_reduction <add>, %88, %cst_33 [0] : vector<8x128xf32> to vector<128xf32>
    %91 = vector.shape_cast %90 : vector<128xf32> to vector<1x128xf32>
    %cst_34 = arith.constant 8.000000e+00 : f32
    %92 = vector.broadcast %cst_34 : f32 to vector<1x128xf32>
    %93 = arith.divf %91, %92 : vector<1x128xf32>
    %94 = vector.extract_strided_slice %20 {offsets = [16, 0], sizes = [8, 128], strides = [1, 1]} : vector<32x128xf32> to vector<8x128xf32>
    %95 = vector.broadcast %93 : vector<1x128xf32> to vector<8x128xf32>
    %96 = arith.addf %94, %95 : vector<8x128xf32>
    %97 = arith.truncf %96 : vector<8x128xf32> to vector<8x128xbf16>
    %cst_35 = arith.constant dense<0.000000e+00> : vector<8x8xf32>
    %98 = tpu.matmul %97, %89, %cst_35 {dimension_numbers = #tpu.dot_dimension_numbers<[1], [1], [0], [0], [0, 0, 1, 0], [], []>} : vector<8x128xbf16>, vector<8x128xbf16>, vector<8x8xf32> -> vector<8x8xf32>
    %c2_i32 = arith.constant 2 : i32
    %99 = arith.addi %0, %c2_i32 : i32
    %100 = arith.index_cast %99 : i32 to index
    %101 = memref.load %arg1[%100] : memref<8xi32, #tpu.memory_space<smem>>
    %102 = vector.broadcast %101 : i32 to vector<8x8xi32>
    %103 = arith.cmpi slt, %21, %102 : vector<8x8xi32>
    %cst_36 = arith.constant -1.000000e+30 : f32
    %104 = vector.broadcast %cst_36 : f32 to vector<8x8xf32>
    %105 = arith.select %103, %98, %104 : vector<8x8xi1>, vector<8x8xf32>
    %cst_37 = arith.constant dense<0xFF800000> : vector<8xf32>
    %106 = vector.multi_reduction <maximumf>, %105, %cst_37 [1] : vector<8x8xf32> to vector<8xf32>
    %107 = vector.shape_cast %106 : vector<8xf32> to vector<8x1xf32>
    %108 = vector.broadcast %107 : vector<8x1xf32> to vector<8x8xf32>
    %109 = arith.subf %105, %108 : vector<8x8xf32>
    %110 = math.exp %109 : vector<8x8xf32>
    %cst_38 = arith.constant dense<0.000000e+00> : vector<8xf32>
    %111 = vector.multi_reduction <add>, %110, %cst_38 [1] : vector<8x8xf32> to vector<8xf32>
    %112 = vector.shape_cast %111 : vector<8xf32> to vector<8x1xf32>
    %113 = tpu.reciprocal %112 {approx = true} : vector<8x1xf32> -> vector<8x1xf32>
    %114 = vector.broadcast %113 : vector<8x1xf32> to vector<8x8xf32>
    %115 = arith.mulf %110, %114 : vector<8x8xf32>
    %c2 = arith.constant 2 : index
    %c0_39 = arith.constant 0 : index
    %c0_40 = arith.constant 0 : index
    %116 = vector.load %arg11[%c2, %c0_39, %c0_40] : memref<4x8x8xf32, #tpu.memory_space<vmem>>, vector<1x8x8xf32>
    %117 = vector.shape_cast %116 : vector<1x8x8xf32> to vector<8x8xf32>
    %118 = vector.shape_cast %115 : vector<8x8xf32> to vector<1x8x8xf32>
    tpu.vector_store %arg11[%c2, %c0_39, %c0_40], %118 {strides = array<i32>} : memref<4x8x8xf32, #tpu.memory_space<vmem>>, vector<1x8x8xf32>,
    %119 = arith.truncf %115 : vector<8x8xf32> to vector<8x8xbf16>
    %cst_41 = arith.constant dense<0.000000e+00> : vector<8x128xf32>
    %120 = tpu.matmul %119, %89, %cst_41 {dimension_numbers = #tpu.dot_dimension_numbers<[1], [0], [0], [1], [0, 0, 1, 1], [], []>} : vector<8x8xbf16>, vector<8x128xbf16>, vector<8x128xf32> -> vector<8x128xf32>
    %121 = vector.extract_strided_slice %10 {offsets = [24, 0], sizes = [8, 128], strides = [1, 1]} : vector<32x128xf32> to vector<8x128xf32>
    %122 = arith.truncf %121 : vector<8x128xf32> to vector<8x128xbf16>
    %cst_42 = arith.constant dense<0.000000e+00> : vector<128xf32>
    %123 = vector.multi_reduction <add>, %121, %cst_42 [0] : vector<8x128xf32> to vector<128xf32>
    %124 = vector.shape_cast %123 : vector<128xf32> to vector<1x128xf32>
    %cst_43 = arith.constant 8.000000e+00 : f32
    %125 = vector.broadcast %cst_43 : f32 to vector<1x128xf32>
    %126 = arith.divf %124, %125 : vector<1x128xf32>
    %127 = vector.extract_strided_slice %20 {offsets = [24, 0], sizes = [8, 128], strides = [1, 1]} : vector<32x128xf32> to vector<8x128xf32>
    %128 = vector.broadcast %126 : vector<1x128xf32> to vector<8x128xf32>
    %129 = arith.addf %127, %128 : vector<8x128xf32>
    %130 = arith.truncf %129 : vector<8x128xf32> to vector<8x128xbf16>
    %cst_44 = arith.constant dense<0.000000e+00> : vector<8x8xf32>
    %131 = tpu.matmul %130, %122, %cst_44 {dimension_numbers = #tpu.dot_dimension_numbers<[1], [1], [0], [0], [0, 0, 1, 0], [], []>} : vector<8x128xbf16>, vector<8x128xbf16>, vector<8x8xf32> -> vector<8x8xf32>
    %c3_i32 = arith.constant 3 : i32
    %132 = arith.addi %0, %c3_i32 : i32
    %133 = arith.index_cast %132 : i32 to index
    %134 = memref.load %arg1[%133] : memref<8xi32, #tpu.memory_space<smem>>
    %135 = vector.broadcast %134 : i32 to vector<8x8xi32>
    %136 = arith.cmpi slt, %21, %135 : vector<8x8xi32>
    %cst_45 = arith.constant -1.000000e+30 : f32
    %137 = vector.broadcast %cst_45 : f32 to vector<8x8xf32>
    %138 = arith.select %136, %131, %137 : vector<8x8xi1>, vector<8x8xf32>
    %cst_46 = arith.constant dense<0xFF800000> : vector<8xf32>
    %139 = vector.multi_reduction <maximumf>, %138, %cst_46 [1] : vector<8x8xf32> to vector<8xf32>
    %140 = vector.shape_cast %139 : vector<8xf32> to vector<8x1xf32>
    %141 = vector.broadcast %140 : vector<8x1xf32> to vector<8x8xf32>
    %142 = arith.subf %138, %141 : vector<8x8xf32>
    %143 = math.exp %142 : vector<8x8xf32>
    %cst_47 = arith.constant dense<0.000000e+00> : vector<8xf32>
    %144 = vector.multi_reduction <add>, %143, %cst_47 [1] : vector<8x8xf32> to vector<8xf32>
    %145 = vector.shape_cast %144 : vector<8xf32> to vector<8x1xf32>
    %146 = tpu.reciprocal %145 {approx = true} : vector<8x1xf32> -> vector<8x1xf32>
    %147 = vector.broadcast %146 : vector<8x1xf32> to vector<8x8xf32>
    %148 = arith.mulf %143, %147 : vector<8x8xf32>
    %c3 = arith.constant 3 : index
    %c0_48 = arith.constant 0 : index
    %c0_49 = arith.constant 0 : index
    %149 = vector.load %arg11[%c3, %c0_48, %c0_49] : memref<4x8x8xf32, #tpu.memory_space<vmem>>, vector<1x8x8xf32>
    %150 = vector.shape_cast %149 : vector<1x8x8xf32> to vector<8x8xf32>
    %151 = vector.shape_cast %148 : vector<8x8xf32> to vector<1x8x8xf32>
    tpu.vector_store %arg11[%c3, %c0_48, %c0_49], %151 {strides = array<i32>} : memref<4x8x8xf32, #tpu.memory_space<vmem>>, vector<1x8x8xf32>,
    %152 = arith.truncf %148 : vector<8x8xf32> to vector<8x8xbf16>
    %cst_50 = arith.constant dense<0.000000e+00> : vector<8x128xf32>
    %153 = tpu.matmul %152, %122, %cst_50 {dimension_numbers = #tpu.dot_dimension_numbers<[1], [0], [0], [1], [0, 0, 1, 1], [], []>} : vector<8x8xbf16>, vector<8x128xbf16>, vector<8x128xf32> -> vector<8x128xf32>
    %154 = tpu.concatenate %54, %87, %120, %153 in 0 : vector<8x128xf32>, vector<8x128xf32>, vector<8x128xf32>, vector<8x128xf32> -> vector<32x128xf32>
    %155 = tpu.concatenate %30, %63, %96, %129 in 0 : vector<8x128xf32>, vector<8x128xf32>, vector<8x128xf32>, vector<8x128xf32> -> vector<32x128xf32>
    %156 = tpu.concatenate %154, %155 in 1 : vector<32x128xf32>, vector<32x128xf32> -> vector<32x256xf32>
    %157 = arith.truncf %156 : vector<32x256xf32> to vector<32x256xbf16>
    %c0_51 = arith.constant 0 : index
    %c0_52 = arith.constant 0 : index
    %158 = vector.load %arg6[%c0_51, %c0_52] : memref<256x128xbf16, #tpu.memory_space<vmem>>, vector<256x128xbf16>
    %cst_53 = arith.constant dense<0.000000e+00> : vector<32x128xf32>
    %159 = tpu.matmul %157, %158, %cst_53 {dimension_numbers = #tpu.dot_dimension_numbers<[1], [0], [0], [1], [0, 0, 1, 1], [], []>} : vector<32x256xbf16>, vector<256x128xbf16>, vector<32x128xf32> -> vector<32x128xf32>
    %c0_54 = arith.constant 0 : index
    %c0_55 = arith.constant 0 : index
    %160 = vector.load %arg9[%c0_54, %c0_55] : memref<1x128xf32, #tpu.memory_space<vmem>>, vector<1x128xf32>
    %161 = vector.broadcast %160 : vector<1x128xf32> to vector<32x128xf32>
    %162 = arith.addf %159, %161 : vector<32x128xf32>
    %163 = math.tanh %162 : vector<32x128xf32>
    %164 = vector.extract_strided_slice %163 {offsets = [0, 0], sizes = [8, 128], strides = [1, 1]} : vector<32x128xf32> to vector<8x128xf32>
    %c0_56 = arith.constant 0 : index
    %c0_57 = arith.constant 0 : index
    %c0_58 = arith.constant 0 : index
    %165 = vector.load %arg10[%c0_56, %c0_57, %c0_58] : memref<4x8x128xf32, #tpu.memory_space<vmem>>, vector<1x8x128xf32>
    %166 = vector.shape_cast %165 : vector<1x8x128xf32> to vector<8x128xf32>
    %167 = vector.shape_cast %164 : vector<8x128xf32> to vector<1x8x128xf32>
    tpu.vector_store %arg10[%c0_56, %c0_57, %c0_58], %167 {strides = array<i32>} : memref<4x8x128xf32, #tpu.memory_space<vmem>>, vector<1x8x128xf32>,
    %168 = vector.extract_strided_slice %163 {offsets = [8, 0], sizes = [8, 128], strides = [1, 1]} : vector<32x128xf32> to vector<8x128xf32>
    %c1_59 = arith.constant 1 : index
    %c0_60 = arith.constant 0 : index
    %c0_61 = arith.constant 0 : index
    %169 = vector.load %arg10[%c1_59, %c0_60, %c0_61] : memref<4x8x128xf32, #tpu.memory_space<vmem>>, vector<1x8x128xf32>
    %170 = vector.shape_cast %169 : vector<1x8x128xf32> to vector<8x128xf32>
    %171 = vector.shape_cast %168 : vector<8x128xf32> to vector<1x8x128xf32>
    tpu.vector_store %arg10[%c1_59, %c0_60, %c0_61], %171 {strides = array<i32>} : memref<4x8x128xf32, #tpu.memory_space<vmem>>, vector<1x8x128xf32>,
    %172 = vector.extract_strided_slice %163 {offsets = [16, 0], sizes = [8, 128], strides = [1, 1]} : vector<32x128xf32> to vector<8x128xf32>
    %c2_62 = arith.constant 2 : index
    %c0_63 = arith.constant 0 : index
    %c0_64 = arith.constant 0 : index
    %173 = vector.load %arg10[%c2_62, %c0_63, %c0_64] : memref<4x8x128xf32, #tpu.memory_space<vmem>>, vector<1x8x128xf32>
    %174 = vector.shape_cast %173 : vector<1x8x128xf32> to vector<8x128xf32>
    %175 = vector.shape_cast %172 : vector<8x128xf32> to vector<1x8x128xf32>
    tpu.vector_store %arg10[%c2_62, %c0_63, %c0_64], %175 {strides = array<i32>} : memref<4x8x128xf32, #tpu.memory_space<vmem>>, vector<1x8x128xf32>,
    %176 = vector.extract_strided_slice %163 {offsets = [24, 0], sizes = [8, 128], strides = [1, 1]} : vector<32x128xf32> to vector<8x128xf32>
    %c3_65 = arith.constant 3 : index
    %c0_66 = arith.constant 0 : index
    %c0_67 = arith.constant 0 : index
    %177 = vector.load %arg10[%c3_65, %c0_66, %c0_67] : memref<4x8x128xf32, #tpu.memory_space<vmem>>, vector<1x8x128xf32>
    %178 = vector.shape_cast %177 : vector<1x8x128xf32> to vector<8x128xf32>
    %179 = vector.shape_cast %176 : vector<8x128xf32> to vector<1x8x128xf32>
    tpu.vector_store %arg10[%c3_65, %c0_66, %c0_67], %179 {strides = array<i32>} : memref<4x8x128xf32, #tpu.memory_space<vmem>>, vector<1x8x128xf32>,
    return
  }
  func.func @transform_0(%arg0: i32, %arg1: memref<8xi32, #tpu.memory_space<smem>>) -> (i32, i32, i32) {
    %c0_i32 = arith.constant 0 : i32
    %c0_i32_0 = arith.constant 0 : i32
    %c0_i32_1 = arith.constant 0 : i32
    return %arg0, %c0_i32, %c0_i32_0 : i32, i32, i32
  }
  func.func @transform_1(%arg0: i32, %arg1: memref<8xi32, #tpu.memory_space<smem>>) -> (i32, i32, i32) {
    %c0_i32 = arith.constant 0 : i32
    %c0_i32_0 = arith.constant 0 : i32
    %c0_i32_1 = arith.constant 0 : i32
    return %arg0, %c0_i32, %c0_i32_0 : i32, i32, i32
  }
  func.func @transform_2(%arg0: i32, %arg1: memref<8xi32, #tpu.memory_space<smem>>) -> (i32, i32) {
    %c0_i32 = arith.constant 0 : i32
    %c0_i32_0 = arith.constant 0 : i32
    %c0_i32_1 = arith.constant 0 : i32
    return %c0_i32, %c0_i32_0 : i32, i32
  }
  func.func @transform_3(%arg0: i32, %arg1: memref<8xi32, #tpu.memory_space<smem>>) -> (i32, i32) {
    %c0_i32 = arith.constant 0 : i32
    %c0_i32_0 = arith.constant 0 : i32
    %c0_i32_1 = arith.constant 0 : i32
    return %c0_i32, %c0_i32_0 : i32, i32
  }
  func.func @transform_4(%arg0: i32, %arg1: memref<8xi32, #tpu.memory_space<smem>>) -> (i32, i32) {
    %c0_i32 = arith.constant 0 : i32
    %c0_i32_0 = arith.constant 0 : i32
    %c0_i32_1 = arith.constant 0 : i32
    return %c0_i32, %c0_i32_0 : i32, i32
  }
  func.func @transform_5(%arg0: i32, %arg1: memref<8xi32, #tpu.memory_space<smem>>) -> (i32, i32) {
    %c0_i32 = arith.constant 0 : i32
    %c0_i32_0 = arith.constant 0 : i32
    %c0_i32_1 = arith.constant 0 : i32
    return %c0_i32, %c0_i32_0 : i32, i32
  }
  func.func @transform_6(%arg0: i32, %arg1: memref<8xi32, #tpu.memory_space<smem>>) -> (i32, i32) {
    %c0_i32 = arith.constant 0 : i32
    %c0_i32_0 = arith.constant 0 : i32
    %c0_i32_1 = arith.constant 0 : i32
    return %c0_i32, %c0_i32_0 : i32, i32
  }
  func.func @transform_7(%arg0: i32, %arg1: memref<8xi32, #tpu.memory_space<smem>>) -> (i32, i32) {
    %c0_i32 = arith.constant 0 : i32
    %c0_i32_0 = arith.constant 0 : i32
    %c0_i32_1 = arith.constant 0 : i32
    return %c0_i32, %c0_i32_0 : i32, i32
  }
  func.func @transform_8(%arg0: i32, %arg1: memref<8xi32, #tpu.memory_space<smem>>) -> (i32, i32, i32) {
    %c0_i32 = arith.constant 0 : i32
    %c0_i32_0 = arith.constant 0 : i32
    %c0_i32_1 = arith.constant 0 : i32
    return %arg0, %c0_i32, %c0_i32_0 : i32, i32, i32
  }
  func.func @transform_9(%arg0: i32, %arg1: memref<8xi32, #tpu.memory_space<smem>>) -> (i32, i32, i32) {
    %c0_i32 = arith.constant 0 : i32
    %c0_i32_0 = arith.constant 0 : i32
    %c0_i32_1 = arith.constant 0 : i32
    return %arg0, %c0_i32, %c0_i32_0 : i32, i32, i32
  }
}

</mosaic_0001>

<llo_original>
// kernel: nmt_forward.1
$region0: #{nmt_forward.1}
  #allocation0 [shape = 'u32[]', space=smem, size = 0x4, offset = 0x4, fixed_abs, tag = 'smem constant byte address 0x4 - core index']
  #allocation1 [shape = 'u32[72,128]{1,0:T(1,128)}', space=vmem, size = 0x9000, scoped, tag = 'internal scratch']
  #allocation2 [shape = 's32[1]{0}', space=sflag, size = 0x4, scoped, tag = 'scoped memory for nmt_forward.1']
  #allocation3 [shape = 'u8[512]{0}', space=smem, size = 0x200, scoped, tag = 'prefetched SMEM operand 0']
  %s0 = inlined_call_operand.vmem [shape: s32[8], index: 0, kind: input, shape index: {}]
  %s1 = inlined_call_operand.vmem [shape: bf16[8,8,32], index: 1, kind: input, shape index: {}]
  %s2 = inlined_call_operand.vmem [shape: bf16[8,8,32], index: 2, kind: input, shape index: {}]
  %s3 = inlined_call_operand.vmem [shape: bf16[32,128], index: 3, kind: input, shape index: {}]
  %s4 = inlined_call_operand.vmem [shape: bf16[32,128], index: 4, kind: input, shape index: {}]
  %s5 = inlined_call_operand.vmem [shape: bf16[256,128], index: 5, kind: input, shape index: {}]
  %s6 = inlined_call_operand.vmem [shape: f32[1,128], index: 6, kind: input, shape index: {}]
  %s7 = inlined_call_operand.vmem [shape: f32[1,128], index: 7, kind: input, shape index: {}]
  %s8 = inlined_call_operand.vmem [shape: f32[1,128], index: 8, kind: input, shape index: {}]
  %s9 = inlined_call_operand.vmem [shape: f32[8,8,128], index: 9, kind: output, shape index: {0}]
  %s10 = inlined_call_operand.vmem [shape: f32[8,8,8], index: 10, kind: output, shape index: {1}]
  %11 = xla_tuple %s9, %s10
  %s12 = sld [smem:[#allocation0]]
  $region73: #{nmt_forward.1} parent=0
    _
  %s14 = ssub.s32 1, %s12
  %s15 = scalar_select 0, %s14, %s12
  %s17 = sshll.u32 %s0, 4
  %s18 = int_to_ptr.vmem [resolvable:$true] %s17
  %20 = dma.vmem_to_smem %s18, 16, [#allocation3], [#allocation2]
  %22 = dma.done [#allocation2], 16
  %23 = sfence
  loop: start=0, step=1, limit=4
  $region2: #{nmt_forward.1} parent=0 // loop_pre_header
    _
  $region3: #{nmt_forward.1} parent=0 // loop_header
    %s25 = sphi 0, %s29
    %p26 = scmp.ge.s32.totalorder %s25, 4
    %s35 = sphi 0, %s37
    %s38 = sphi 0, %s35
    %s39 = sphi 0, %s38
    %s55 = sphi 0, %s39
    %s61 = sphi 0, %s63
    %s64 = sphi 0, %s61
    %s65 = sphi 0, %s64
    %s81 = sphi 0, %s65
    %s85 = sphi 0, %s85
    %s87 = sphi 0, %s85
    %s88 = sphi 0, %s87
    %s102 = sphi 0, %s88
    %s106 = sphi 0, %s106
    %s108 = sphi 0, %s106
    %s109 = sphi 0, %s108
    %s123 = sphi 0, %s109
    %s127 = sphi 0, %s127
    %s129 = sphi 0, %s127
    %s130 = sphi 0, %s129
    %s144 = sphi 0, %s130
    %s148 = sphi 0, %s148
    %s150 = sphi 0, %s148
    %s151 = sphi 0, %s150
    %s165 = sphi 0, %s151
    %s169 = sphi 0, %s169
    %s171 = sphi 0, %s169
    %s172 = sphi 0, %s171
    %s186 = sphi 0, %s172
    %s190 = sphi 0, %s190
    %s192 = sphi 0, %s190
    %s193 = sphi 0, %s192
    %s207 = sphi 0, %s193
    %s213 = sphi 0, %s215
    %s216 = sphi 0, %s213
    %s217 = sphi 0, %s216
    %s233 = sphi 0, %s217
    %s239 = sphi 0, %s241
    %s242 = sphi 0, %s239
    %s243 = sphi 0, %s242
    %s259 = sphi 0, %s243
  $region4: #{nmt_forward.1} parent=0 // loop_header_branch
    %28 = sbr.rel (%p26) target = $region8
  $region5: #{nmt_forward.1} parent=0 // loop_body
    %s30 = ssub.s32 %s25, 1
    %s31 = ssub.s32 %s25, 2
    %s32 = sadd.s32 %s25, 1
    %s33 = ssub.s32 %s25, %s32
    %p34 = scmp.eq.s32.totalorder %s33, 0
    %s36 = sadd.s32 %s35, 1
    %s37 = scalar_select %p34, %s35, %s36
    %p40 = pneg %p34
    %p41 = scmp.eq.s32.totalorder %s25, 1
    %p42 = por %p40, %p41
    %p43 = scmp.ne.s32.totalorder %s35, %s38
    %p44 = scmp.eq.s32.totalorder %s25, 0
    %p45 = por %p43, %p44
    %p46 = scmp.ne.s32.totalorder %s35, %s38
    %p47 = scmp.eq.s32.totalorder %s30, 1
    %p48 = por %p46, %p47
    %p49 = scmp.ne.s32.totalorder %s38, %s39
    %p50 = scmp.eq.s32.totalorder %s30, 0
    %p51 = por %p49, %p50
    %p52 = scmp.ne.s32.totalorder %s38, %s39
    %p53 = scmp.eq.s32.totalorder %s31, 1
    %p54 = por %p52, %p53
    %p56 = scmp.ne.s32.totalorder %s39, %s55
    %p57 = scmp.eq.s32.totalorder %s31, 0
    %p58 = por %p56, %p57
    %s59 = ssub.s32 %s25, %s32
    %p60 = scmp.eq.s32.totalorder %s59, 0
    %s62 = sadd.s32 %s61, 1
    %s63 = scalar_select %p60, %s61, %s62
    %p66 = pneg %p60
    %p67 = scmp.eq.s32.totalorder %s25, 1
    %p68 = por %p66, %p67
    %p69 = scmp.ne.s32.totalorder %s61, %s64
    %p70 = scmp.eq.s32.totalorder %s25, 0
    %p71 = por %p69, %p70
    %p72 = scmp.ne.s32.totalorder %s61, %s64
    %p73 = scmp.eq.s32.totalorder %s30, 1
    %p74 = por %p72, %p73
    %p75 = scmp.ne.s32.totalorder %s64, %s65
    %p76 = scmp.eq.s32.totalorder %s30, 0
    %p77 = por %p75, %p76
    %p78 = scmp.ne.s32.totalorder %s64, %s65
    %p79 = scmp.eq.s32.totalorder %s31, 1
    %p80 = por %p78, %p79
    %p82 = scmp.ne.s32.totalorder %s65, %s81
    %p83 = scmp.eq.s32.totalorder %s31, 0
    %p84 = por %p82, %p83
    %s86 = sadd.s32 %s85, 1
    %p89 = scmp.eq.s32.totalorder %s25, 1
    %p90 = scmp.ne.s32.totalorder %s85, %s87
    %p91 = scmp.eq.s32.totalorder %s25, 0
    %p92 = por %p90, %p91
    %p93 = scmp.ne.s32.totalorder %s85, %s87
    %p94 = scmp.eq.s32.totalorder %s30, 1
    %p95 = por %p93, %p94
    %p96 = scmp.ne.s32.totalorder %s87, %s88
    %p97 = scmp.eq.s32.totalorder %s30, 0
    %p98 = por %p96, %p97
    %p99 = scmp.ne.s32.totalorder %s87, %s88
    %p100 = scmp.eq.s32.totalorder %s31, 1
    %p101 = por %p99, %p100
    %p103 = scmp.ne.s32.totalorder %s88, %s102
    %p104 = scmp.eq.s32.totalorder %s31, 0
    %p105 = por %p103, %p104
    %s107 = sadd.s32 %s106, 1
    %p110 = scmp.eq.s32.totalorder %s25, 1
    %p111 = scmp.ne.s32.totalorder %s106, %s108
    %p112 = scmp.eq.s32.totalorder %s25, 0
    %p113 = por %p111, %p112
    %p114 = scmp.ne.s32.totalorder %s106, %s108
    %p115 = scmp.eq.s32.totalorder %s30, 1
    %p116 = por %p114, %p115
    %p117 = scmp.ne.s32.totalorder %s108, %s109
    %p118 = scmp.eq.s32.totalorder %s30, 0
    %p119 = por %p117, %p118
    %p120 = scmp.ne.s32.totalorder %s108, %s109
    %p121 = scmp.eq.s32.totalorder %s31, 1
    %p122 = por %p120, %p121
    %p124 = scmp.ne.s32.totalorder %s109, %s123
    %p125 = scmp.eq.s32.totalorder %s31, 0
    %p126 = por %p124, %p125
    %s128 = sadd.s32 %s127, 1
    %p131 = scmp.eq.s32.totalorder %s25, 1
    %p132 = scmp.ne.s32.totalorder %s127, %s129
    %p133 = scmp.eq.s32.totalorder %s25, 0
    %p134 = por %p132, %p133
    %p135 = scmp.ne.s32.totalorder %s127, %s129
    %p136 = scmp.eq.s32.totalorder %s30, 1
    %p137 = por %p135, %p136
    %p138 = scmp.ne.s32.totalorder %s129, %s130
    %p139 = scmp.eq.s32.totalorder %s30, 0
    %p140 = por %p138, %p139
    %p141 = scmp.ne.s32.totalorder %s129, %s130
    %p142 = scmp.eq.s32.totalorder %s31, 1
    %p143 = por %p141, %p142
    %p145 = scmp.ne.s32.totalorder %s130, %s144
    %p146 = scmp.eq.s32.totalorder %s31, 0
    %p147 = por %p145, %p146
    %s149 = sadd.s32 %s148, 1
    %p152 = scmp.eq.s32.totalorder %s25, 1
    %p153 = scmp.ne.s32.totalorder %s148, %s150
    %p154 = scmp.eq.s32.totalorder %s25, 0
    %p155 = por %p153, %p154
    %p156 = scmp.ne.s32.totalorder %s148, %s150
    %p157 = scmp.eq.s32.totalorder %s30, 1
    %p158 = por %p156, %p157
    %p159 = scmp.ne.s32.totalorder %s150, %s151
    %p160 = scmp.eq.s32.totalorder %s30, 0
    %p161 = por %p159, %p160
    %p162 = scmp.ne.s32.totalorder %s150, %s151
    %p163 = scmp.eq.s32.totalorder %s31, 1
    %p164 = por %p162, %p163
    %p166 = scmp.ne.s32.totalorder %s151, %s165
    %p167 = scmp.eq.s32.totalorder %s31, 0
    %p168 = por %p166, %p167
    %s170 = sadd.s32 %s169, 1
    %p173 = scmp.eq.s32.totalorder %s25, 1
    %p174 = scmp.ne.s32.totalorder %s169, %s171
    %p175 = scmp.eq.s32.totalorder %s25, 0
    %p176 = por %p174, %p175
    %p177 = scmp.ne.s32.totalorder %s169, %s171
    %p178 = scmp.eq.s32.totalorder %s30, 1
    %p179 = por %p177, %p178
    %p180 = scmp.ne.s32.totalorder %s171, %s172
    %p181 = scmp.eq.s32.totalorder %s30, 0
    %p182 = por %p180, %p181
    %p183 = scmp.ne.s32.totalorder %s171, %s172
    %p184 = scmp.eq.s32.totalorder %s31, 1
    %p185 = por %p183, %p184
    %p187 = scmp.ne.s32.totalorder %s172, %s186
    %p188 = scmp.eq.s32.totalorder %s31, 0
    %p189 = por %p187, %p188
    %s191 = sadd.s32 %s190, 1
    %p194 = scmp.eq.s32.totalorder %s25, 1
    %p195 = scmp.ne.s32.totalorder %s190, %s192
    %p196 = scmp.eq.s32.totalorder %s25, 0
    %p197 = por %p195, %p196
    %p198 = scmp.ne.s32.totalorder %s190, %s192
    %p199 = scmp.eq.s32.totalorder %s30, 1
    %p200 = por %p198, %p199
    %p201 = scmp.ne.s32.totalorder %s192, %s193
    %p202 = scmp.eq.s32.totalorder %s30, 0
    %p203 = por %p201, %p202
    %p204 = scmp.ne.s32.totalorder %s192, %s193
    %p205 = scmp.eq.s32.totalorder %s31, 1
    %p206 = por %p204, %p205
    %p208 = scmp.ne.s32.totalorder %s193, %s207
    %p209 = scmp.eq.s32.totalorder %s31, 0
    %p210 = por %p208, %p209
    %s211 = ssub.s32 %s25, %s32
    %p212 = scmp.eq.s32.totalorder %s211, 0
    %s214 = sadd.s32 %s213, 1
    %s215 = scalar_select %p212, %s213, %s214
    %p218 = pneg %p212
    %p219 = scmp.eq.s32.totalorder %s25, 1
    %p220 = por %p218, %p219
    %p221 = scmp.ne.s32.totalorder %s213, %s216
    %p222 = scmp.eq.s32.totalorder %s25, 0
    %p223 = por %p221, %p222
    %p224 = scmp.ne.s32.totalorder %s213, %s216
    %p225 = scmp.eq.s32.totalorder %s30, 1
    %p226 = por %p224, %p225
    %p227 = scmp.ne.s32.totalorder %s216, %s217
    %p228 = scmp.eq.s32.totalorder %s30, 0
    %p229 = por %p227, %p228
    %p230 = scmp.ne.s32.totalorder %s216, %s217
    %p231 = scmp.eq.s32.totalorder %s31, 1
    %p232 = por %p230, %p231
    %p234 = scmp.ne.s32.totalorder %s217, %s233
    %p235 = scmp.eq.s32.totalorder %s31, 0
    %p236 = por %p234, %p235
    %s237 = ssub.s32 %s25, %s32
    %p238 = scmp.eq.s32.totalorder %s237, 0
    %s240 = sadd.s32 %s239, 1
    %s241 = scalar_select %p238, %s239, %s240
    %p244 = pneg %p238
    %p245 = scmp.eq.s32.totalorder %s25, 1
    %p246 = por %p244, %p245
    %p247 = scmp.ne.s32.totalorder %s239, %s242
    %p248 = scmp.eq.s32.totalorder %s25, 0
    %p249 = por %p247, %p248
    %p250 = scmp.ne.s32.totalorder %s239, %s242
    %p251 = scmp.eq.s32.totalorder %s30, 1
    %p252 = por %p250, %p251
    %p253 = scmp.ne.s32.totalorder %s242, %s243
    %p254 = scmp.eq.s32.totalorder %s30, 0
    %p255 = por %p253, %p254
    %p256 = scmp.ne.s32.totalorder %s242, %s243
    %p257 = scmp.eq.s32.totalorder %s31, 1
    %p258 = por %p256, %p257
    %p260 = scmp.ne.s32.totalorder %s243, %s259
    %p261 = scmp.eq.s32.totalorder %s31, 0
    %p262 = por %p260, %p261
    %p263 = scmp.le.s32.totalorder 1, %s25
    %p264 = scmp.lt.s32.totalorder %s25, 3
    %p265 = pnand %p263, %p264
    %p266 = pneg %p265
    // Predicated region
    $region9: #{nmt_forward.1} parent=5 // pred_check
      _
    $region10: #{nmt_forward.1} parent=5 // pred_check_branch
      %268 = sbr.rel (%p265) target = $region12
    $region11: #{nmt_forward.1} parent=5 // pred_region
      %s269 = ssub.s32 %s25, 1
      // Predicated region
      $region13: #{nmt_forward.1} parent=11 // pred_check
        %p270 = pneg %p98
      $region14: #{nmt_forward.1} parent=11 // pred_check_branch
        %272 = sbr.rel (%p270) target = $region16
      $region15: #{nmt_forward.1} parent=11 // pred_region
        _
      $region16: #{nmt_forward.1} parent=11 // pred_fallthru
        _
      // Predicated region
      $region17: #{nmt_forward.1} parent=11 // pred_check
        %p273 = pneg %p119
      $region18: #{nmt_forward.1} parent=11 // pred_check_branch
        %275 = sbr.rel (%p273) target = $region20
      $region19: #{nmt_forward.1} parent=11 // pred_region
        _
      $region20: #{nmt_forward.1} parent=11 // pred_fallthru
        _
      // Predicated region
      $region21: #{nmt_forward.1} parent=11 // pred_check
        %p276 = pneg %p140
      $region22: #{nmt_forward.1} parent=11 // pred_check_branch
        %278 = sbr.rel (%p276) target = $region24
      $region23: #{nmt_forward.1} parent=11 // pred_region
        _
      $region24: #{nmt_forward.1} parent=11 // pred_fallthru
        _
      // Predicated region
      $region25: #{nmt_forward.1} parent=11 // pred_check
        %p279 = pneg %p161
      $region26: #{nmt_forward.1} parent=11 // pred_check_branch
        %281 = sbr.rel (%p279) target = $region28
      $region27: #{nmt_forward.1} parent=11 // pred_region
        _
      $region28: #{nmt_forward.1} parent=11 // pred_fallthru
        _
      // Predicated region
      $region29: #{nmt_forward.1} parent=11 // pred_check
        %p282 = pneg %p182
      $region30: #{nmt_forward.1} parent=11 // pred_check_branch
        %284 = sbr.rel (%p282) target = $region32
      $region31: #{nmt_forward.1} parent=11 // pred_region
        _
      $region32: #{nmt_forward.1} parent=11 // pred_fallthru
        _
      // Predicated region
      $region33: #{nmt_forward.1} parent=11 // pred_check
        %p285 = pneg %p203
      $region34: #{nmt_forward.1} parent=11 // pred_check_branch
        %287 = sbr.rel (%p285) target = $region36
      $region35: #{nmt_forward.1} parent=11 // pred_region
        _
      $region36: #{nmt_forward.1} parent=11 // pred_fallthru
        _
    $region12: #{nmt_forward.1} parent=5 // pred_fallthru
      _
    %p288 = scmp.lt.s32.totalorder %s25, 2
    // Predicated region
    $region37: #{nmt_forward.1} parent=5 // pred_check
      %p289 = pneg %p288
    $region38: #{nmt_forward.1} parent=5 // pred_check_branch
      %291 = sbr.rel (%p289) target = $region40
    $region39: #{nmt_forward.1} parent=5 // pred_region
      // Predicated region
      $region41: #{nmt_forward.1} parent=39 // pred_check
        %p292 = pneg %p45
      $region42: #{nmt_forward.1} parent=39 // pred_check_branch
        %294 = sbr.rel (%p292) target = $region44
      $region43: #{nmt_forward.1} parent=39 // pred_region
        %s295 = smul.u32 4, %s25
        %p296 = scmp.lt.s32.totalorder %s295, 7
        %s297 = scalar_select %p296, %s295, 7
        %s298 = smul.addr %s297, 4
        %s299 = scalar_lea.vmem %s1, %s298
        %s300 = smul.u32 4, %s25
      $region44: #{nmt_forward.1} parent=39 // pred_fallthru
        _
      // Predicated region
      $region45: #{nmt_forward.1} parent=39 // pred_check
        %p301 = pneg %p71
      $region46: #{nmt_forward.1} parent=39 // pred_check_branch
        %303 = sbr.rel (%p301) target = $region48
      $region47: #{nmt_forward.1} parent=39 // pred_region
        %s304 = smul.u32 4, %s25
        %p305 = scmp.lt.s32.totalorder %s304, 7
        %s306 = scalar_select %p305, %s304, 7
        %s307 = smul.addr %s306, 4
        %s308 = scalar_lea.vmem %s2, %s307
        %s309 = smul.u32 4, %s25
      $region48: #{nmt_forward.1} parent=39 // pred_fallthru
        _
    $region40: #{nmt_forward.1} parent=5 // pred_fallthru
      _
    %p310 = scmp.le.s32.totalorder 1, %s25
    %p311 = scmp.lt.s32.totalorder %s25, 3
    %p312 = pnand %p310, %p311
    %p313 = pneg %p312
    // Predicated region
    $region49: #{nmt_forward.1} parent=5 // pred_check
      _
    $region50: #{nmt_forward.1} parent=5 // pred_check_branch
      %315 = sbr.rel (%p312) target = $region52
    $region51: #{nmt_forward.1} parent=5 // pred_region
      %s316 = ssub.s32 %s25, 1
      %s317 = smul.u32 4, %s30
      %p318 = scmp.lt.s32.totalorder %s317, 7
      %s319 = scalar_select %p318, %s317, 7
      %s320 = smul.addr %s319, 4
      %s321 = scalar_lea.vmem %s1, %s320
      %p322 = pneg %p51
      %p323 = pneg %p48
      %s324 = smul.u32 4, %s30
      %p325 = scmp.lt.s32.totalorder %s324, 7
      %s326 = scalar_select %p325, %s324, 7
      %s327 = smul.addr %s326, 4
      %s328 = scalar_lea.vmem %s2, %s327
      %p329 = pneg %p77
      %p330 = pneg %p74
      %p331 = pneg %p98
      %p332 = pneg %p95
      %p333 = pneg %p119
      %p334 = pneg %p116
      %p335 = pneg %p140
      %p336 = pneg %p137
      %p337 = pneg %p161
      %p338 = pneg %p158
      %p339 = pneg %p182
      %p340 = pneg %p179
      %p341 = pneg %p203
      %p342 = pneg %p200
      %p343 = pneg %p229
      %p344 = pneg %p226
      %s345 = smul.u32 4, %s30
      %p346 = scmp.lt.s32.totalorder %s345, 7
      %s347 = scalar_select %p346, %s345, 7
      %s348 = smul.addr %s347, 8
      %s349 = scalar_lea.vmem %s9, %s348
      %p350 = pneg %p255
      %p351 = pneg %p252
      %s352 = smul.u32 4, %s30
      %p353 = scmp.lt.s32.totalorder %s352, 7
      %s354 = scalar_select %p353, %s352, 7
      %s355 = smul.addr %s354, 8
      %s356 = scalar_lea.vmem %s10, %s355
      %s357 = smul.u32 4, %s30
      %p358 = scmp.lt.s32.totalorder %s357, 7
      %s359 = scalar_select %p358, %s357, 7
      %s360 = smul.addr %s359, 4
      %s361 = scalar_lea.vmem %s1, %s360
      %s362 = smul.u32 4, %s30
      %s363 = smul.u32 4, %s30
      %p364 = scmp.lt.s32.totalorder %s363, 7
      %s365 = scalar_select %p364, %s363, 7
      %s366 = smul.addr %s365, 4
      %s367 = scalar_lea.vmem %s2, %s366
      %s368 = smul.u32 4, %s30
      %s369 = smul.u32 4, %s30
      %p370 = scmp.lt.s32.totalorder %s369, 7
      %s371 = scalar_select %p370, %s369, 7
      %s372 = smul.addr %s371, 8
      %s373 = scalar_lea.vmem %s9, %s372
      %s374 = smul.u32 4, %s30
      %s375 = smul.u32 4, %s30
      %p376 = scmp.lt.s32.totalorder %s375, 7
      %s377 = scalar_select %p376, %s375, 7
      %s378 = smul.addr %s377, 8
      %s379 = scalar_lea.vmem %s10, %s378
      %s380 = smul.u32 4, %s30
      %s382 = smul.u32 %s30, 4
      %v383 = vld [vmem:[%s361] sm:$0xf]
      %v384 = vld [vmem:[%s361 + $0x4] sm:$0xf]
      %v385 = vld [vmem:[%s361 + $0x8] sm:$0xf]
      %v386 = vld [vmem:[%s361 + $0xc] sm:$0xf]
      %v387 = vunpack.c.l.bf16 %v383
      %v388 = vunpack.c.l.bf16 %v384
      %v389 = vunpack.c.l.bf16 %v385
      %v390 = vunpack.c.l.bf16 %v386
      %v391 = vpack.c.bf16 %v388, %v387
      %v392 = vpack.c.bf16 %v390, %v389
      %v393 = vld [vmem:[%s3] sm:$0xf]
      %v394 = vld [vmem:[%s3 + $0x4] sm:$0xf]
      %v395 = vld [vmem:[%s3 + $0x8] sm:$0xf]
      %v396 = vld [vmem:[%s3 + $0xc] sm:$0xf]
      %v397 = vld [vmem:[%s6] sm:$0x1]
      %v399 = vperm.slane %v397, 0
      %v405 = vunpack.c.l.b16 %v393
      %v406 = vunpack.c.l.b16 %v394
      %v407 = vunpack.c.l.b16 %v395
      %v408 = vunpack.c.l.b16 %v396
      %v409 = vpack.c.b16 %v406, %v405
      %v410 = vpack.c.b16 %v408, %v407
      %vm413 = vcmask 261120
      %v415 = vsel %vm413, %v391, 0
      %v418 = vsel %vm413, %v392, 0
      %420 = vmatpush.bf16.msra.mxu0 0
      %421 = vmatpush.bf16.msra.mxu0 0
      %422 = vmatpush.bf16.msra.mxu0 0
      %423 = vmatpush.bf16.msra.mxu0 0
      %424 = vmatpush.bf16.msra.mxu0 0
      %425 = vmatpush.bf16.msra.mxu0 0
      %426 = vmatpush.bf16.msra.mxu0 %v410
      %427 = vmatpush.bf16.msra.mxu0 %v409
      %428 = vmatmul.bf16.gmra.mxu0 %v415
      %v429 = vpop.f32.mrf.mxu0
      %v430 = vadd.f32 %v399, %v429
      %v431 = vpop.f32.mrf.mxu0
      %v432 = vadd.f32 %v399, %v431
      %433 = vmatmul.bf16.gmra.mxu0 %v418
      %v434 = vpop.f32.mrf.mxu0
      %v435 = vadd.f32 %v399, %v434
      %v436 = vpop.f32.mrf.mxu0
      %v437 = vadd.f32 %v399, %v436
      %438 = vdwg.mxu0
      %v439 = vtanh.pop %v430
      %v440 = vtanh.pop %v432
      %v441 = vtanh.pop %v435
      %v442 = vtanh.pop %v437
      %v443 = vld [vmem:[%s367] sm:$0xf]
      %v444 = vld [vmem:[%s367 + $0x4] sm:$0xf]
      %v445 = vld [vmem:[%s367 + $0x8] sm:$0xf]
      %v446 = vld [vmem:[%s367 + $0xc] sm:$0xf]
      %v447 = vunpack.c.l.bf16 %v443
      %v448 = vunpack.c.l.bf16 %v444
      %v449 = vunpack.c.l.bf16 %v445
      %v450 = vunpack.c.l.bf16 %v446
      %v451 = vpack.c.bf16 %v448, %v447
      %v452 = vpack.c.bf16 %v450, %v449
      %v453 = vld [vmem:[%s4] sm:$0xf]
      %v454 = vld [vmem:[%s4 + $0x4] sm:$0xf]
      %v455 = vld [vmem:[%s4 + $0x8] sm:$0xf]
      %v456 = vld [vmem:[%s4 + $0xc] sm:$0xf]
      %v457 = vld [vmem:[%s7] sm:$0x1]
      %v459 = vperm.slane %v457, 0
      %v465 = vunpack.c.l.b16 %v453
      %v466 = vunpack.c.l.b16 %v454
      %v467 = vunpack.c.l.b16 %v455
      %v468 = vunpack.c.l.b16 %v456
      %v469 = vpack.c.b16 %v466, %v465
      %v470 = vpack.c.b16 %v468, %v467
      %v474 = vsel %vm413, %v451, 0
      %v477 = vsel %vm413, %v452, 0
      %479 = vmatpush.bf16.msra.mxu0 0
      %480 = vmatpush.bf16.msra.mxu0 0
      %481 = vmatpush.bf16.msra.mxu0 0
      %482 = vmatpush.bf16.msra.mxu0 0
      %483 = vmatpush.bf16.msra.mxu0 0
      %484 = vmatpush.bf16.msra.mxu0 0
      %485 = vmatpush.bf16.msra.mxu0 %v470
      %486 = vmatpush.bf16.msra.mxu0 %v469
      %487 = vmatmul.bf16.gmra.mxu0 %v474
      %v488 = vpop.f32.mrf.mxu0
      %v489 = vadd.f32 %v459, %v488
      %v490 = vpop.f32.mrf.mxu0
      %v491 = vadd.f32 %v459, %v490
      %492 = vmatmul.bf16.gmra.mxu0 %v477
      %v493 = vpop.f32.mrf.mxu0
      %v494 = vadd.f32 %v459, %v493
      %v495 = vpop.f32.mrf.mxu0
      %v496 = vadd.f32 %v459, %v495
      %497 = vdwg.mxu0
      %v498 = vtanh.pop %v489
      %v499 = vtanh.pop %v491
      %v500 = vtanh.pop %v494
      %v501 = vtanh.pop %v496
      %v502 = vlaneseq
      %v503 = vand.u32 %v502, 127
      %v504 = vpack.c.bf16 %v439, %v439
      %v505 = vrot.slane %v439, 4
      %v506 = vadd.f32 %v439, %v505
      %v507 = vrot.slane %v506, 2
      %v508 = vadd.f32 %v506, %v507
      %v509 = vrot.slane %v508, 1
      %v510 = vadd.f32 %v508, %v509
      %v511 = vrcp.pop 8.0
      %v512 = vmul.f32 8.0, %v511
      %v513 = vsub.f32 1.0, %v512
      %v514 = vmul.f32 %v511, %v513
      %v515 = vadd.f32 %v511, %v514
      %vm516 = vweird.f32 %v511
      %v517 = vsel %vm516, %v511, %v515
      %v518 = vmul.f32 %v510, %v517
      %v519 = vadd.f32 %v498, %v518
      %v520 = vpack.c.bf16 %v519, %v519
      %521 = vmatpush.bf16.xpose.msra.mxu0 0
      %522 = vmatpush.bf16.xpose.msra.mxu0 0
      %523 = vmatpush.bf16.xpose.msra.mxu0 0
      %524 = vmatpush.bf16.xpose.msra.mxu0 0
      %525 = vmatpush.bf16.xpose.msra.mxu0 0
      %526 = vmatpush.bf16.xpose.msra.mxu0 0
      %527 = vmatpush.bf16.xpose.msra.mxu0 0
      %528 = vmatpush.bf16.xpose.msra.mxu0 %v504
      %529 = vmatmul.bf16.gmra.mxu0 %v520
      %v530 = vpop.f32.mrf.mxu0
      %v531 = vadd.f32 0.0, %v530
      %v532 = vpop.f32.mrf.mxu0
      %533 = vdwg.mxu0
      %s534 = sld [smem:[#allocation3 + %s382]]
      %v535 = vstv %s534
      %vm536 = vcmp.lt.s32.totalorder %v503, %v535
      %v537 = vsel %vm536, %v531, -1e+30
      %vm538 = vcmask 64512
      %v539 = vsel %vm538, %v537, -inf
      %540 = vmax.xlane.f32.xlu0 %v539
      %v541 = vpop.xlane.xlu0 %540
      %v542 = vsub.f32 %v537, %v541
      %v543 = vmul.f32 %v542, 1.442695
      %v544 = vpow.pop %v543
      %v545 = vsel %vm538, %v544, 0.0
      %546 = vadd.xlane.f32.xlu0 %v545
      %v547 = vpop.xlane.xlu0 %546
      %v548 = vrcp.pop %v547
      %v549 = vmul.f32 %v544, %v548
      %550 = vst.msk [vmem:[%s379] sm:$0xff] %vm538, %v549
      %v551 = vpack.c.bf16 %v549, %v549
      %v553 = vsel %vm538, %v551, 0
      %vm555 = vcmask 1043456
      %v557 = vsel %vm555, %v504, 0
      %559 = vmatpush.bf16.msra.mxu0 0
      %560 = vmatpush.bf16.msra.mxu0 0
      %561 = vmatpush.bf16.msra.mxu0 0
      %562 = vmatpush.bf16.msra.mxu0 0
      %563 = vmatpush.bf16.msra.mxu0 0
      %564 = vmatpush.bf16.msra.mxu0 0
      %565 = vmatpush.bf16.msra.mxu0 0
      %566 = vmatpush.bf16.msra.mxu0 %v557
      %567 = vmatmul.bf16.gmra.mxu0 %v553
      %v568 = vpop.f32.mrf.mxu0
      %v569 = vadd.f32 0.0, %v568
      %v570 = vpop.f32.mrf.mxu0
      %571 = vdwg.mxu0
      %v572 = vpack.c.bf16 %v440, %v440
      %v573 = vrot.slane %v440, 4
      %v574 = vadd.f32 %v440, %v573
      %v575 = vrot.slane %v574, 2
      %v576 = vadd.f32 %v574, %v575
      %v577 = vrot.slane %v576, 1
      %v578 = vadd.f32 %v576, %v577
      %v579 = vmul.f32 %v578, %v517
      %v580 = vadd.f32 %v499, %v579
      %v581 = vpack.c.bf16 %v580, %v580
      %582 = vmatpush.bf16.xpose.msra.mxu0 0
      %583 = vmatpush.bf16.xpose.msra.mxu0 0
      %584 = vmatpush.bf16.xpose.msra.mxu0 0
      %585 = vmatpush.bf16.xpose.msra.mxu0 0
      %586 = vmatpush.bf16.xpose.msra.mxu0 0
      %587 = vmatpush.bf16.xpose.msra.mxu0 0
      %588 = vmatpush.bf16.xpose.msra.mxu0 0
      %589 = vmatpush.bf16.xpose.msra.mxu0 %v572
      %590 = vmatmul.bf16.gmra.mxu0 %v581
      %v591 = vpop.f32.mrf.mxu0
      %v592 = vadd.f32 0.0, %v591
      %v593 = vpop.f32.mrf.mxu0
      %594 = vdwg.mxu0
      %s595 = sadd.s32 %s382, 1
      %s596 = sld [smem:[#allocation3 + %s595]]
      %v597 = vstv %s596
      %vm598 = vcmp.lt.s32.totalorder %v503, %v597
      %v599 = vsel %vm598, %v592, -1e+30
      %v600 = vsel %vm538, %v599, -inf
      %601 = vmax.xlane.f32.xlu0 %v600
      %v602 = vpop.xlane.xlu0 %601
      %v603 = vsub.f32 %v599, %v602
      %v604 = vmul.f32 %v603, 1.442695
      %v605 = vpow.pop %v604
      %v606 = vsel %vm538, %v605, 0.0
      %607 = vadd.xlane.f32.xlu0 %v606
      %v608 = vpop.xlane.xlu0 %607
      %v609 = vrcp.pop %v608
      %v610 = vmul.f32 %v605, %v609
      %s611 = scalar_lea.vmem %s379, 8
      %612 = vst.msk [vmem:[%s611] sm:$0xff] %vm538, %v610
      %v613 = vpack.c.bf16 %v610, %v610
      %v615 = vsel %vm538, %v613, 0
      %v618 = vsel %vm555, %v572, 0
      %620 = vmatpush.bf16.msra.mxu0 0
      %621 = vmatpush.bf16.msra.mxu0 0
      %622 = vmatpush.bf16.msra.mxu0 0
      %623 = vmatpush.bf16.msra.mxu0 0
      %624 = vmatpush.bf16.msra.mxu0 0
      %625 = vmatpush.bf16.msra.mxu0 0
      %626 = vmatpush.bf16.msra.mxu0 0
      %627 = vmatpush.bf16.msra.mxu0 %v618
      %628 = vmatmul.bf16.gmra.mxu0 %v615
      %v629 = vpop.f32.mrf.mxu0
      %v630 = vadd.f32 0.0, %v629
      %v631 = vpop.f32.mrf.mxu0
      %632 = vdwg.mxu0
      %v633 = vpack.c.bf16 %v441, %v441
      %v634 = vrot.slane %v441, 4
      %v635 = vadd.f32 %v441, %v634
      %v636 = vrot.slane %v635, 2
      %v637 = vadd.f32 %v635, %v636
      %v638 = vrot.slane %v637, 1
      %v639 = vadd.f32 %v637, %v638
      %v640 = vmul.f32 %v639, %v517
      %v641 = vadd.f32 %v500, %v640
      %v642 = vpack.c.bf16 %v641, %v641
      %643 = vmatpush.bf16.xpose.msra.mxu0 0
      %644 = vmatpush.bf16.xpose.msra.mxu0 0
      %645 = vmatpush.bf16.xpose.msra.mxu0 0
      %646 = vmatpush.bf16.xpose.msra.mxu0 0
      %647 = vmatpush.bf16.xpose.msra.mxu0 0
      %648 = vmatpush.bf16.xpose.msra.mxu0 0
      %649 = vmatpush.bf16.xpose.msra.mxu0 0
      %650 = vmatpush.bf16.xpose.msra.mxu0 %v633
      %651 = vmatmul.bf16.gmra.mxu0 %v642
      %v652 = vpop.f32.mrf.mxu0
      %v653 = vadd.f32 0.0, %v652
      %v654 = vpop.f32.mrf.mxu0
      %655 = vdwg.mxu0
      %s656 = sadd.s32 %s382, 2
      %s657 = sld [smem:[#allocation3 + %s656]]
      %v658 = vstv %s657
      %vm659 = vcmp.lt.s32.totalorder %v503, %v658
      %v660 = vsel %vm659, %v653, -1e+30
      %v661 = vsel %vm538, %v660, -inf
      %662 = vmax.xlane.f32.xlu0 %v661
      %v663 = vpop.xlane.xlu0 %662
      %v664 = vsub.f32 %v660, %v663
      %v665 = vmul.f32 %v664, 1.442695
      %v666 = vpow.pop %v665
      %v667 = vsel %vm538, %v666, 0.0
      %668 = vadd.xlane.f32.xlu0 %v667
      %v669 = vpop.xlane.xlu0 %668
      %v670 = vrcp.pop %v669
      %v671 = vmul.f32 %v666, %v670
      %s672 = scalar_lea.vmem %s379, 16
      %673 = vst.msk [vmem:[%s672] sm:$0xff] %vm538, %v671
      %v674 = vpack.c.bf16 %v671, %v671
      %v676 = vsel %vm538, %v674, 0
      %v679 = vsel %vm555, %v633, 0
      %681 = vmatpush.bf16.msra.mxu0 0
      %682 = vmatpush.bf16.msra.mxu0 0
      %683 = vmatpush.bf16.msra.mxu0 0
      %684 = vmatpush.bf16.msra.mxu0 0
      %685 = vmatpush.bf16.msra.mxu0 0
      %686 = vmatpush.bf16.msra.mxu0 0
      %687 = vmatpush.bf16.msra.mxu0 0
      %688 = vmatpush.bf16.msra.mxu0 %v679
      %689 = vmatmul.bf16.gmra.mxu0 %v676
      %v690 = vpop.f32.mrf.mxu0
      %v691 = vadd.f32 0.0, %v690
      %v692 = vpop.f32.mrf.mxu0
      %693 = vdwg.mxu0
      %v694 = vpack.c.bf16 %v442, %v442
      %v695 = vrot.slane %v442, 4
      %v696 = vadd.f32 %v442, %v695
      %v697 = vrot.slane %v696, 2
      %v698 = vadd.f32 %v696, %v697
      %v699 = vrot.slane %v698, 1
      %v700 = vadd.f32 %v698, %v699
      %v701 = vmul.f32 %v700, %v517
      %v702 = vadd.f32 %v501, %v701
      %v703 = vpack.c.bf16 %v702, %v702
      %704 = vmatpush.bf16.xpose.msra.mxu0 0
      %705 = vmatpush.bf16.xpose.msra.mxu0 0
      %706 = vmatpush.bf16.xpose.msra.mxu0 0
      %707 = vmatpush.bf16.xpose.msra.mxu0 0
      %708 = vmatpush.bf16.xpose.msra.mxu0 0
      %709 = vmatpush.bf16.xpose.msra.mxu0 0
      %710 = vmatpush.bf16.xpose.msra.mxu0 0
      %711 = vmatpush.bf16.xpose.msra.mxu0 %v694
      %712 = vmatmul.bf16.gmra.mxu0 %v703
      %v713 = vpop.f32.mrf.mxu0
      %v714 = vadd.f32 0.0, %v713
      %v715 = vpop.f32.mrf.mxu0
      %716 = vdwg.mxu0
      %s717 = sadd.s32 %s382, 3
      %s718 = sld [smem:[#allocation3 + %s717]]
      %v719 = vstv %s718
      %vm720 = vcmp.lt.s32.totalorder %v503, %v719
      %v721 = vsel %vm720, %v714, -1e+30
      %v722 = vsel %vm538, %v721, -inf
      %723 = vmax.xlane.f32.xlu0 %v722
      %v724 = vpop.xlane.xlu0 %723
      %v725 = vsub.f32 %v721, %v724
      %v726 = vmul.f32 %v725, 1.442695
      %v727 = vpow.pop %v726
      %v728 = vsel %vm538, %v727, 0.0
      %729 = vadd.xlane.f32.xlu0 %v728
      %v730 = vpop.xlane.xlu0 %729
      %v731 = vrcp.pop %v730
      %v732 = vmul.f32 %v727, %v731
      %s733 = scalar_lea.vmem %s379, 24
      %734 = vst.msk [vmem:[%s733] sm:$0xff] %vm538, %v732
      %v735 = vpack.c.bf16 %v732, %v732
      %v737 = vsel %vm538, %v735, 0
      %v740 = vsel %vm555, %v694, 0
      %742 = vmatpush.bf16.msra.mxu0 0
      %743 = vmatpush.bf16.msra.mxu0 0
      %744 = vmatpush.bf16.msra.mxu0 0
      %745 = vmatpush.bf16.msra.mxu0 0
      %746 = vmatpush.bf16.msra.mxu0 0
      %747 = vmatpush.bf16.msra.mxu0 0
      %748 = vmatpush.bf16.msra.mxu0 0
      %749 = vmatpush.bf16.msra.mxu0 %v740
      %750 = vmatmul.bf16.gmra.mxu0 %v737
      %v751 = vpop.f32.mrf.mxu0
      %v752 = vadd.f32 0.0, %v751
      %v753 = vpop.f32.mrf.mxu0
      %754 = vdwg.mxu0
      %v755 = vpack.c.bf16 %v630, %v569
      %v756 = vpack.c.bf16 %v580, %v519
      %v757 = vpack.c.bf16 %v752, %v691
      %v758 = vpack.c.bf16 %v702, %v641
      %v759 = vld [vmem:[%s5] sm:$0xf]
      %v760 = vld [vmem:[%s5 + $0x4] sm:$0xf]
      %v761 = vld [vmem:[%s5 + $0x8] sm:$0xf]
      %v762 = vld [vmem:[%s5 + $0xc] sm:$0xf]
      %v763 = vld [vmem:[%s5 + $0x10] sm:$0xf]
      %v764 = vld [vmem:[%s5 + $0x14] sm:$0xf]
      %v765 = vld [vmem:[%s5 + $0x18] sm:$0xf]
      %v766 = vld [vmem:[%s5 + $0x1c] sm:$0xf]
      %v767 = vld [vmem:[%s5 + $0x20] sm:$0xf]
      %v768 = vld [vmem:[%s5 + $0x24] sm:$0xf]
      %v769 = vld [vmem:[%s5 + $0x28] sm:$0xf]
      %v770 = vld [vmem:[%s5 + $0x2c] sm:$0xf]
      %v771 = vld [vmem:[%s5 + $0x30] sm:$0xf]
      %v772 = vld [vmem:[%s5 + $0x34] sm:$0xf]
      %v773 = vld [vmem:[%s5 + $0x38] sm:$0xf]
      %v774 = vld [vmem:[%s5 + $0x3c] sm:$0xf]
      %v775 = vld [vmem:[%s5 + $0x40] sm:$0xf]
      %v776 = vld [vmem:[%s5 + $0x44] sm:$0xf]
      %v777 = vld [vmem:[%s5 + $0x48] sm:$0xf]
      %v778 = vld [vmem:[%s5 + $0x4c] sm:$0xf]
      %v779 = vld [vmem:[%s5 + $0x50] sm:$0xf]
      %v780 = vld [vmem:[%s5 + $0x54] sm:$0xf]
      %v781 = vld [vmem:[%s5 + $0x58] sm:$0xf]
      %v782 = vld [vmem:[%s5 + $0x5c] sm:$0xf]
      %v783 = vld [vmem:[%s5 + $0x60] sm:$0xf]
      %v784 = vld [vmem:[%s5 + $0x64] sm:$0xf]
      %v785 = vld [vmem:[%s5 + $0x68] sm:$0xf]
      %v786 = vld [vmem:[%s5 + $0x6c] sm:$0xf]
      %v787 = vld [vmem:[%s5 + $0x70] sm:$0xf]
      %v788 = vld [vmem:[%s5 + $0x74] sm:$0xf]
      %v789 = vld [vmem:[%s5 + $0x78] sm:$0xf]
      %v790 = vld [vmem:[%s5 + $0x7c] sm:$0xf]
      %v791 = vld [vmem:[%s8] sm:$0x1]
      %v793 = vperm.slane %v791, 0
      %v827 = vunpack.c.l.b16 %v759
      %v828 = vunpack.c.l.b16 %v760
      %v829 = vunpack.c.l.b16 %v761
      %v830 = vunpack.c.l.b16 %v762
      %v831 = vunpack.c.l.b16 %v763
      %v832 = vunpack.c.l.b16 %v764
      %v833 = vunpack.c.l.b16 %v765
      %v834 = vunpack.c.l.b16 %v766
      %v835 = vunpack.c.l.b16 %v767
      %v836 = vunpack.c.l.b16 %v768
      %v837 = vunpack.c.l.b16 %v769
      %v838 = vunpack.c.l.b16 %v770
      %v839 = vunpack.c.l.b16 %v771
      %v840 = vunpack.c.l.b16 %v772
      %v841 = vunpack.c.l.b16 %v773
      %v842 = vunpack.c.l.b16 %v774
      %v843 = vunpack.c.l.b16 %v775
      %v844 = vunpack.c.l.b16 %v776
      %v845 = vunpack.c.l.b16 %v777
      %v846 = vunpack.c.l.b16 %v778
      %v847 = vunpack.c.l.b16 %v779
      %v848 = vunpack.c.l.b16 %v780
      %v849 = vunpack.c.l.b16 %v781
      %v850 = vunpack.c.l.b16 %v782
      %v851 = vunpack.c.l.b16 %v783
      %v852 = vunpack.c.l.b16 %v784
      %v853 = vunpack.c.l.b16 %v785
      %v854 = vunpack.c.l.b16 %v786
      %v855 = vunpack.c.l.b16 %v787
      %v856 = vunpack.c.l.b16 %v788
      %v857 = vunpack.c.l.b16 %v789
      %v858 = vunpack.c.l.b16 %v790
      %v859 = vpack.c.b16 %v828, %v827
      %v860 = vpack.c.b16 %v830, %v829
      %v861 = vpack.c.b16 %v832, %v831
      %v862 = vpack.c.b16 %v834, %v833
      %v863 = vpack.c.b16 %v836, %v835
      %v864 = vpack.c.b16 %v838, %v837
      %v865 = vpack.c.b16 %v840, %v839
      %v866 = vpack.c.b16 %v842, %v841
      %v867 = vpack.c.b16 %v844, %v843
      %v868 = vpack.c.b16 %v846, %v845
      %v869 = vpack.c.b16 %v848, %v847
      %v870 = vpack.c.b16 %v850, %v849
      %v871 = vpack.c.b16 %v852, %v851
      %v872 = vpack.c.b16 %v854, %v853
      %v873 = vpack.c.b16 %v856, %v855
      %v874 = vpack.c.b16 %v858, %v857
      %891 = vmatpush.bf16.msra.mxu0 %v866
      %892 = vmatpush.bf16.msra.mxu0 %v865
      %893 = vmatpush.bf16.msra.mxu0 %v864
      %894 = vmatpush.bf16.msra.mxu0 %v863
      %895 = vmatpush.bf16.msra.mxu0 %v862
      %896 = vmatpush.bf16.msra.mxu0 %v861
      %897 = vmatpush.bf16.msra.mxu0 %v860
      %898 = vmatpush.bf16.msra.mxu0 %v859
      %899 = vmatmul.bf16.gmra.mxu0 %v755
      %v900 = vpop.f32.mrf.mxu0
      %v901 = vadd.f32 %v793, %v900
      %v902 = vpop.f32.mrf.mxu0
      %v903 = vadd.f32 %v793, %v902
      %904 = vmatmul.bf16.gmra.mxu0 %v757
      %v905 = vpop.f32.mrf.mxu0
      %v906 = vadd.f32 %v793, %v905
      %v907 = vpop.f32.mrf.mxu0
      %v908 = vadd.f32 %v793, %v907
      %909 = vdwg.mxu0
      %910 = vmatpush.bf16.msra.mxu0 %v874
      %911 = vmatpush.bf16.msra.mxu0 %v873
      %912 = vmatpush.bf16.msra.mxu0 %v872
      %913 = vmatpush.bf16.msra.mxu0 %v871
      %914 = vmatpush.bf16.msra.mxu0 %v870
      %915 = vmatpush.bf16.msra.mxu0 %v869
      %916 = vmatpush.bf16.msra.mxu0 %v868
      %917 = vmatpush.bf16.msra.mxu0 %v867
      %918 = vmatmul.bf16.gmra.mxu0 %v756
      %v919 = vpop.f32.mrf.mxu0
      %v920 = vadd.f32 %v901, %v919
      %v921 = vpop.f32.mrf.mxu0
      %v922 = vadd.f32 %v903, %v921
      %923 = vmatmul.bf16.gmra.mxu0 %v758
      %v924 = vpop.f32.mrf.mxu0
      %v925 = vadd.f32 %v906, %v924
      %v926 = vpop.f32.mrf.mxu0
      %v927 = vadd.f32 %v908, %v926
      %928 = vdwg.mxu0
      %v929 = vtanh.pop %v920
      %v930 = vtanh.pop %v922
      %v931 = vtanh.pop %v925
      %v932 = vtanh.pop %v927
      %933 = vst [vmem:[%s373] sm:$0xff] %v929
      %s934 = scalar_lea.vmem %s373, 8
      %935 = vst [vmem:[%s934] sm:$0xff] %v930
      %s936 = scalar_lea.vmem %s373, 16
      %937 = vst [vmem:[%s936] sm:$0xff] %v931
      %s938 = scalar_lea.vmem %s373, 24
      %939 = vst [vmem:[%s938] sm:$0xff] %v932
      %s940 = smul.u32 4, %s30
      %p941 = scmp.lt.s32.totalorder %s940, 7
      %s942 = scalar_select %p941, %s940, 7
      %s943 = smul.addr %s942, 8
      %s944 = scalar_lea.vmem %s9, %s943
      %s945 = smul.u32 4, %s30
      %p946 = scmp.lt.s32.totalorder %s945, 7
      %s947 = scalar_select %p946, %s945, 7
      %s948 = smul.addr %s947, 8
      %s949 = scalar_lea.vmem %s10, %s948
      // Predicated region
      $region53: #{nmt_forward.1} parent=51 // pred_check
        %p950 = pneg %p226
      $region54: #{nmt_forward.1} parent=51 // pred_check_branch
        %952 = sbr.rel (%p950) target = $region56
      $region55: #{nmt_forward.1} parent=51 // pred_region
        %s953 = smul.u32 4, %s30
      $region56: #{nmt_forward.1} parent=51 // pred_fallthru
        _
      // Predicated region
      $region57: #{nmt_forward.1} parent=51 // pred_check
        %p954 = pneg %p252
      $region58: #{nmt_forward.1} parent=51 // pred_check_branch
        %956 = sbr.rel (%p954) target = $region60
      $region59: #{nmt_forward.1} parent=51 // pred_region
        %s957 = smul.u32 4, %s30
      $region60: #{nmt_forward.1} parent=51 // pred_fallthru
        _
    $region52: #{nmt_forward.1} parent=5 // pred_fallthru
      _
    %p958 = scmp.le.s32.totalorder 2, %s25
    // Predicated region
    $region61: #{nmt_forward.1} parent=5 // pred_check
      %p959 = pneg %p958
    $region62: #{nmt_forward.1} parent=5 // pred_check_branch
      %961 = sbr.rel (%p959) target = $region64
    $region63: #{nmt_forward.1} parent=5 // pred_region
      %s962 = ssub.s32 %s25, 2
      // Predicated region
      $region65: #{nmt_forward.1} parent=63 // pred_check
        %p963 = pneg %p232
      $region66: #{nmt_forward.1} parent=63 // pred_check_branch
        %965 = sbr.rel (%p963) target = $region68
      $region67: #{nmt_forward.1} parent=63 // pred_region
        %s966 = smul.u32 4, %s31
        %p967 = scmp.lt.s32.totalorder %s966, 7
        %s968 = scalar_select %p967, %s966, 7
        %s969 = smul.addr %s968, 8
        %s970 = scalar_lea.vmem %s9, %s969
      $region68: #{nmt_forward.1} parent=63 // pred_fallthru
        _
      // Predicated region
      $region69: #{nmt_forward.1} parent=63 // pred_check
        %p971 = pneg %p258
      $region70: #{nmt_forward.1} parent=63 // pred_check_branch
        %973 = sbr.rel (%p971) target = $region72
      $region71: #{nmt_forward.1} parent=63 // pred_region
        %s974 = smul.u32 4, %s31
        %p975 = scmp.lt.s32.totalorder %s974, 7
        %s976 = scalar_select %p975, %s974, 7
        %s977 = smul.addr %s976, 8
        %s978 = scalar_lea.vmem %s10, %s977
      $region72: #{nmt_forward.1} parent=63 // pred_fallthru
        _
    $region64: #{nmt_forward.1} parent=5 // pred_fallthru
      _
  $region6: #{nmt_forward.1} parent=0 // loop_footer
    %s29 = sadd.s32 1, %s25
  $region7: #{nmt_forward.1} parent=0 // loop_footer_branch
    %24 = sbr.rel target = $region3
  $region8: #{nmt_forward.1} parent=0 // loop_exit
    _

// kernel: nmt_forward.1
$region0: #{nmt_forward.1}
  #allocation0 [shape = 'u32[]', space=smem, size = 0x4, offset = 0x4, fixed_abs, tag = 'smem constant byte address 0x4 - core index']
  #allocation1 [shape = 'u32[72,128]{1,0:T(1,128)}', space=vmem, size = 0x9000, scoped, tag = 'internal scratch']
  #allocation2 [shape = 's32[1]{0}', space=sflag, size = 0x4, scoped, tag = 'scoped memory for nmt_forward.1']
  #allocation3 [shape = 'u8[512]{0}', space=smem, size = 0x200, scoped, tag = 'prefetched SMEM operand 0']
  %s0 = inlined_call_operand.vmem [shape: s32[8], index: 0, kind: input, shape index: {}]
  %s1 = inlined_call_operand.vmem [shape: bf16[8,8,32], index: 1, kind: input, shape index: {}]
  %s2 = inlined_call_operand.vmem [shape: bf16[8,8,32], index: 2, kind: input, shape index: {}]
  %s3 = inlined_call_operand.vmem [shape: bf16[32,128], index: 3, kind: input, shape index: {}]
  %s4 = inlined_call_operand.vmem [shape: bf16[32,128], index: 4, kind: input, shape index: {}]
  %s5 = inlined_call_operand.vmem [shape: bf16[256,128], index: 5, kind: input, shape index: {}]
  %s6 = inlined_call_operand.vmem [shape: f32[1,128], index: 6, kind: input, shape index: {}]
  %s7 = inlined_call_operand.vmem [shape: f32[1,128], index: 7, kind: input, shape index: {}]
  %s8 = inlined_call_operand.vmem [shape: f32[1,128], index: 8, kind: input, shape index: {}]
  %s9 = inlined_call_operand.vmem [shape: f32[8,8,128], index: 9, kind: output, shape index: {0}]
  %s10 = inlined_call_operand.vmem [shape: f32[8,8,8], index: 10, kind: output, shape index: {1}]
  %11 = xla_tuple %s9, %s10
  %s12 = sld [smem:[#allocation0]]
  $region73: #{nmt_forward.1} parent=0
    _
  %s14 = ssub.s32 1, %s12
  %s15 = scalar_select 0, %s14, %s12
  %s17 = sshll.u32 %s0, 4
  %s18 = int_to_ptr.vmem [resolvable:$true] %s17
  %20 = dma.vmem_to_smem %s18, 16, [#allocation3], [#allocation2]
  %22 = dma.done [#allocation2], 16
  %23 = sfence
  loop: start=0, step=1, limit=4
  $region2: #{nmt_forward.1} parent=0 // loop_pre_header
    _
  $region3: #{nmt_forward.1} parent=0 // loop_header
    %s25 = sphi 0, %s29
    %p26 = scmp.ge.s32.totalorder %s25, 4
    %s35 = sphi 0, %s37
    %s38 = sphi 0, %s35
    %s39 = sphi 0, %s38
    %s55 = sphi 0, %s39
    %s61 = sphi 0, %s63
    %s64 = sphi 0, %s61
    %s65 = sphi 0, %s64
    %s81 = sphi 0, %s65
    %s85 = sphi 0, %s85
    %s87 = sphi 0, %s85
    %s88 = sphi 0, %s87
    %s102 = sphi 0, %s88
    %s106 = sphi 0, %s106
    %s108 = sphi 0, %s106
    %s109 = sphi 0, %s108
    %s123 = sphi 0, %s109
    %s127 = sphi 0, %s127
    %s129 = sphi 0, %s127
    %s130 = sphi 0, %s129
    %s144 = sphi 0, %s130
    %s148 = sphi 0, %s148
    %s150 = sphi 0, %s148
    %s151 = sphi 0, %s150
    %s165 = sphi 0, %s151
    %s169 = sphi 0, %s169
    %s171 = sphi 0, %s169
    %s172 = sphi 0, %s171
    %s186 = sphi 0, %s172
    %s190 = sphi 0, %s190
    %s192 = sphi 0, %s190
    %s193 = sphi 0, %s192
    %s207 = sphi 0, %s193
    %s213 = sphi 0, %s215
    %s216 = sphi 0, %s213
    %s217 = sphi 0, %s216
    %s233 = sphi 0, %s217
    %s239 = sphi 0, %s241
    %s242 = sphi 0, %s239
    %s243 = sphi 0, %s242
    %s259 = sphi 0, %s243
  $region4: #{nmt_forward.1} parent=0 // loop_header_branch
    %28 = sbr.rel (%p26) target = $region8
  $region5: #{nmt_forward.1} parent=0 // loop_body
    %s30 = ssub.s32 %s25, 1
    %s31 = ssub.s32 %s25, 2
    %s32 = sadd.s32 %s25, 1
    %s33 = ssub.s32 %s25, %s32
    %p34 = scmp.eq.s32.totalorder %s33, 0
    %s36 = sadd.s32 %s35, 1
    %s37 = scalar_select %p34, %s35, %s36
    %p40 = pneg %p34
    %p41 = scmp.eq.s32.totalorder %s25, 1
    %p42 = por %p40, %p41
    %p43 = scmp.ne.s32.totalorder %s35, %s38
    %p44 = scmp.eq.s32.totalorder %s25, 0
    %p45 = por %p43, %p44
    %p46 = scmp.ne.s32.totalorder %s35, %s38
    %p47 = scmp.eq.s32.totalorder %s30, 1
    %p48 = por %p46, %p47
    %p49 = scmp.ne.s32.totalorder %s38, %s39
    %p50 = scmp.eq.s32.totalorder %s30, 0
    %p51 = por %p49, %p50
    %p52 = scmp.ne.s32.totalorder %s38, %s39
    %p53 = scmp.eq.s32.totalorder %s31, 1
    %p54 = por %p52, %p53
    %p56 = scmp.ne.s32.totalorder %s39, %s55
    %p57 = scmp.eq.s32.totalorder %s31, 0
    %p58 = por %p56, %p57
    %s59 = ssub.s32 %s25, %s32
    %p60 = scmp.eq.s32.totalorder %s59, 0
    %s62 = sadd.s32 %s61, 1
    %s63 = scalar_select %p60, %s61, %s62
    %p66 = pneg %p60
    %p67 = scmp.eq.s32.totalorder %s25, 1
    %p68 = por %p66, %p67
    %p69 = scmp.ne.s32.totalorder %s61, %s64
    %p70 = scmp.eq.s32.totalorder %s25, 0
    %p71 = por %p69, %p70
    %p72 = scmp.ne.s32.totalorder %s61, %s64
    %p73 = scmp.eq.s32.totalorder %s30, 1
    %p74 = por %p72, %p73
    %p75 = scmp.ne.s32.totalorder %s64, %s65
    %p76 = scmp.eq.s32.totalorder %s30, 0
    %p77 = por %p75, %p76
    %p78 = scmp.ne.s32.totalorder %s64, %s65
    %p79 = scmp.eq.s32.totalorder %s31, 1
    %p80 = por %p78, %p79
    %p82 = scmp.ne.s32.totalorder %s65, %s81
    %p83 = scmp.eq.s32.totalorder %s31, 0
    %p84 = por %p82, %p83
    %s86 = sadd.s32 %s85, 1
    %p89 = scmp.eq.s32.totalorder %s25, 1
    %p90 = scmp.ne.s32.totalorder %s85, %s87
    %p91 = scmp.eq.s32.totalorder %s25, 0
    %p92 = por %p90, %p91
    %p93 = scmp.ne.s32.totalorder %s85, %s87
    %p94 = scmp.eq.s32.totalorder %s30, 1
    %p95 = por %p93, %p94
    %p96 = scmp.ne.s32.totalorder %s87, %s88
    %p97 = scmp.eq.s32.totalorder %s30, 0
    %p98 = por %p96, %p97
    %p99 = scmp.ne.s32.totalorder %s87, %s88
    %p100 = scmp.eq.s32.totalorder %s31, 1
    %p101 = por %p99, %p100
    %p103 = scmp.ne.s32.totalorder %s88, %s102
    %p104 = scmp.eq.s32.totalorder %s31, 0
    %p105 = por %p103, %p104
    %s107 = sadd.s32 %s106, 1
    %p110 = scmp.eq.s32.totalorder %s25, 1
    %p111 = scmp.ne.s32.totalorder %s106, %s108
    %p112 = scmp.eq.s32.totalorder %s25, 0
    %p113 = por %p111, %p112
    %p114 = scmp.ne.s32.totalorder %s106, %s108
    %p115 = scmp.eq.s32.totalorder %s30, 1
    %p116 = por %p114, %p115
    %p117 = scmp.ne.s32.totalorder %s108, %s109
    %p118 = scmp.eq.s32.totalorder %s30, 0
    %p119 = por %p117, %p118
    %p120 = scmp.ne.s32.totalorder %s108, %s109
    %p121 = scmp.eq.s32.totalorder %s31, 1
    %p122 = por %p120, %p121
    %p124 = scmp.ne.s32.totalorder %s109, %s123
    %p125 = scmp.eq.s32.totalorder %s31, 0
    %p126 = por %p124, %p125
    %s128 = sadd.s32 %s127, 1
    %p131 = scmp.eq.s32.totalorder %s25, 1
    %p132 = scmp.ne.s32.totalorder %s127, %s129
    %p133 = scmp.eq.s32.totalorder %s25, 0
    %p134 = por %p132, %p133
    %p135 = scmp.ne.s32.totalorder %s127, %s129
    %p136 = scmp.eq.s32.totalorder %s30, 1
    %p137 = por %p135, %p136
    %p138 = scmp.ne.s32.totalorder %s129, %s130
    %p139 = scmp.eq.s32.totalorder %s30, 0
    %p140 = por %p138, %p139
    %p141 = scmp.ne.s32.totalorder %s129, %s130
    %p142 = scmp.eq.s32.totalorder %s31, 1
    %p143 = por %p141, %p142
    %p145 = scmp.ne.s32.totalorder %s130, %s144
    %p146 = scmp.eq.s32.totalorder %s31, 0
    %p147 = por %p145, %p146
    %s149 = sadd.s32 %s148, 1
    %p152 = scmp.eq.s32.totalorder %s25, 1
    %p153 = scmp.ne.s32.totalorder %s148, %s150
    %p154 = scmp.eq.s32.totalorder %s25, 0
    %p155 = por %p153, %p154
    %p156 = scmp.ne.s32.totalorder %s148, %s150
    %p157 = scmp.eq.s32.totalorder %s30, 1
    %p158 = por %p156, %p157
    %p159 = scmp.ne.s32.totalorder %s150, %s151
    %p160 = scmp.eq.s32.totalorder %s30, 0
    %p161 = por %p159, %p160
    %p162 = scmp.ne.s32.totalorder %s150, %s151
    %p163 = scmp.eq.s32.totalorder %s31, 1
    %p164 = por %p162, %p163
    %p166 = scmp.ne.s32.totalorder %s151, %s165
    %p167 = scmp.eq.s32.totalorder %s31, 0
    %p168 = por %p166, %p167
    %s170 = sadd.s32 %s169, 1
    %p173 = scmp.eq.s32.totalorder %s25, 1
    %p174 = scmp.ne.s32.totalorder %s169, %s171
    %p175 = scmp.eq.s32.totalorder %s25, 0
    %p176 = por %p174, %p175
    %p177 = scmp.ne.s32.totalorder %s169, %s171
    %p178 = scmp.eq.s32.totalorder %s30, 1
    %p179 = por %p177, %p178
    %p180 = scmp.ne.s32.totalorder %s171, %s172
    %p181 = scmp.eq.s32.totalorder %s30, 0
    %p182 = por %p180, %p181
    %p183 = scmp.ne.s32.totalorder %s171, %s172
    %p184 = scmp.eq.s32.totalorder %s31, 1
    %p185 = por %p183, %p184
    %p187 = scmp.ne.s32.totalorder %s172, %s186
    %p188 = scmp.eq.s32.totalorder %s31, 0
    %p189 = por %p187, %p188
    %s191 = sadd.s32 %s190, 1
    %p194 = scmp.eq.s32.totalorder %s25, 1
    %p195 = scmp.ne.s32.totalorder %s190, %s192
    %p196 = scmp.eq.s32.totalorder %s25, 0
    %p197 = por %p195, %p196
    %p198 = scmp.ne.s32.totalorder %s190, %s192
    %p199 = scmp.eq.s32.totalorder %s30, 1
    %p200 = por %p198, %p199
    %p201 = scmp.ne.s32.totalorder %s192, %s193
    %p202 = scmp.eq.s32.totalorder %s30, 0
    %p203 = por %p201, %p202
    %p204 = scmp.ne.s32.totalorder %s192, %s193
    %p205 = scmp.eq.s32.totalorder %s31, 1
    %p206 = por %p204, %p205
    %p208 = scmp.ne.s32.totalorder %s193, %s207
    %p209 = scmp.eq.s32.totalorder %s31, 0
    %p210 = por %p208, %p209
    %s211 = ssub.s32 %s25, %s32
    %p212 = scmp.eq.s32.totalorder %s211, 0
    %s214 = sadd.s32 %s213, 1
    %s215 = scalar_select %p212, %s213, %s214
    %p218 = pneg %p212
    %p219 = scmp.eq.s32.totalorder %s25, 1
    %p220 = por %p218, %p219
    %p221 = scmp.ne.s32.totalorder %s213, %s216
    %p222 = scmp.eq.s32.totalorder %s25, 0
    %p223 = por %p221, %p222
    %p224 = scmp.ne.s32.totalorder %s213, %s216
    %p225 = scmp.eq.s32.totalorder %s30, 1
    %p226 = por %p224, %p225
    %p227 = scmp.ne.s32.totalorder %s216, %s217
    %p228 = scmp.eq.s32.totalorder %s30, 0
    %p229 = por %p227, %p228
    %p230 = scmp.ne.s32.totalorder %s216, %s217
    %p231 = scmp.eq.s32.totalorder %s31, 1
    %p232 = por %p230, %p231
    %p234 = scmp.ne.s32.totalorder %s217, %s233
    %p235 = scmp.eq.s32.totalorder %s31, 0
    %p236 = por %p234, %p235
    %s237 = ssub.s32 %s25, %s32
    %p238 = scmp.eq.s32.totalorder %s237, 0
    %s240 = sadd.s32 %s239, 1
    %s241 = scalar_select %p238, %s239, %s240
    %p244 = pneg %p238
    %p245 = scmp.eq.s32.totalorder %s25, 1
    %p246 = por %p244, %p245
    %p247 = scmp.ne.s32.totalorder %s239, %s242
    %p248 = scmp.eq.s32.totalorder %s25, 0
    %p249 = por %p247, %p248
    %p250 = scmp.ne.s32.totalorder %s239, %s242
    %p251 = scmp.eq.s32.totalorder %s30, 1
    %p252 = por %p250, %p251
    %p253 = scmp.ne.s32.totalorder %s242, %s243
    %p254 = scmp.eq.s32.totalorder %s30, 0
    %p255 = por %p253, %p254
    %p256 = scmp.ne.s32.totalorder %s242, %s243
    %p257 = scmp.eq.s32.totalorder %s31, 1
    %p258 = por %p256, %p257
    %p260 = scmp.ne.s32.totalorder %s243, %s259
    %p261 = scmp.eq.s32.totalorder %s31, 0
    %p262 = por %p260, %p261
    %p263 = scmp.le.s32.totalorder 1, %s25
    %p264 = scmp.lt.s32.totalorder %s25, 3
    %p265 = pnand %p263, %p264
    %p266 = pneg %p265
    // Predicated region
    $region9: #{nmt_forward.1} parent=5 // pred_check
      _
    $region10: #{nmt_forward.1} parent=5 // pred_check_branch
      %268 = sbr.rel (%p265) target = $region12
    $region11: #{nmt_forward.1} parent=5 // pred_region
      %s269 = ssub.s32 %s25, 1
      // Predicated region
      $region13: #{nmt_forward.1} parent=11 // pred_check
        %p270 = pneg %p98
      $region14: #{nmt_forward.1} parent=11 // pred_check_branch
        %272 = sbr.rel (%p270) target = $region16
      $region15: #{nmt_forward.1} parent=11 // pred_region
        _
      $region16: #{nmt_forward.1} parent=11 // pred_fallthru
        _
      // Predicated region
      $region17: #{nmt_forward.1} parent=11 // pred_check
        %p273 = pneg %p119
      $region18: #{nmt_forward.1} parent=11 // pred_check_branch
        %275 = sbr.rel (%p273) target = $region20
      $region19: #{nmt_forward.1} parent=11 // pred_region
        _
      $region20: #{nmt_forward.1} parent=11 // pred_fallthru
        _
      // Predicated region
      $region21: #{nmt_forward.1} parent=11 // pred_check
        %p276 = pneg %p140
      $region22: #{nmt_forward.1} parent=11 // pred_check_branch
        %278 = sbr.rel (%p276) target = $region24
      $region23: #{nmt_forward.1} parent=11 // pred_region
        _
      $region24: #{nmt_forward.1} parent=11 // pred_fallthru
        _
      // Predicated region
      $region25: #{nmt_forward.1} parent=11 // pred_check
        %p279 = pneg %p161
      $region26: #{nmt_forward.1} parent=11 // pred_check_branch
        %281 = sbr.rel (%p279) target = $region28
      $region27: #{nmt_forward.1} parent=11 // pred_region
        _
      $region28: #{nmt_forward.1} parent=11 // pred_fallthru
        _
      // Predicated region
      $region29: #{nmt_forward.1} parent=11 // pred_check
        %p282 = pneg %p182
      $region30: #{nmt_forward.1} parent=11 // pred_check_branch
        %284 = sbr.rel (%p282) target = $region32
      $region31: #{nmt_forward.1} parent=11 // pred_region
        _
      $region32: #{nmt_forward.1} parent=11 // pred_fallthru
        _
      // Predicated region
      $region33: #{nmt_forward.1} parent=11 // pred_check
        %p285 = pneg %p203
      $region34: #{nmt_forward.1} parent=11 // pred_check_branch
        %287 = sbr.rel (%p285) target = $region36
      $region35: #{nmt_forward.1} parent=11 // pred_region
        _
      $region36: #{nmt_forward.1} parent=11 // pred_fallthru
        _
    $region12: #{nmt_forward.1} parent=5 // pred_fallthru
      _
    %p288 = scmp.lt.s32.totalorder %s25, 2
    // Predicated region
    $region37: #{nmt_forward.1} parent=5 // pred_check
      %p289 = pneg %p288
    $region38: #{nmt_forward.1} parent=5 // pred_check_branch
      %291 = sbr.rel (%p289) target = $region40
    $region39: #{nmt_forward.1} parent=5 // pred_region
      // Predicated region
      $region41: #{nmt_forward.1} parent=39 // pred_check
        %p292 = pneg %p45
      $region42: #{nmt_forward.1} parent=39 // pred_check_branch
        %294 = sbr.rel (%p292) target = $region44
      $region43: #{nmt_forward.1} parent=39 // pred_region
        %s295 = smul.u32 4, %s25
        %p296 = scmp.lt.s32.totalorder %s295, 7
        %s297 = scalar_select %p296, %s295, 7
        %s298 = smul.addr %s297, 4
        %s299 = scalar_lea.vmem %s1, %s298
        %s300 = smul.u32 4, %s25
      $region44: #{nmt_forward.1} parent=39 // pred_fallthru
        _
      // Predicated region
      $region45: #{nmt_forward.1} parent=39 // pred_check
        %p301 = pneg %p71
      $region46: #{nmt_forward.1} parent=39 // pred_check_branch
        %303 = sbr.rel (%p301) target = $region48
      $region47: #{nmt_forward.1} parent=39 // pred_region
        %s304 = smul.u32 4, %s25
        %p305 = scmp.lt.s32.totalorder %s304, 7
        %s306 = scalar_select %p305, %s304, 7
        %s307 = smul.addr %s306, 4
        %s308 = scalar_lea.vmem %s2, %s307
        %s309 = smul.u32 4, %s25
      $region48: #{nmt_forward.1} parent=39 // pred_fallthru
        _
    $region40: #{nmt_forward.1} parent=5 // pred_fallthru
      _
    %p310 = scmp.le.s32.totalorder 1, %s25
    %p311 = scmp.lt.s32.totalorder %s25, 3
    %p312 = pnand %p310, %p311
    %p313 = pneg %p312
    // Predicated region
    $region49: #{nmt_forward.1} parent=5 // pred_check
      _
    $region50: #{nmt_forward.1} parent=5 // pred_check_branch
      %315 = sbr.rel (%p312) target = $region52
    $region51: #{nmt_forward.1} parent=5 // pred_region
      %s316 = ssub.s32 %s25, 1
      %s317 = smul.u32 4, %s30
      %p318 = scmp.lt.s32.totalorder %s317, 7
      %s319 = scalar_select %p318, %s317, 7
      %s320 = smul.addr %s319, 4
      %s321 = scalar_lea.vmem %s1, %s320
      %p322 = pneg %p51
      %p323 = pneg %p48
      %s324 = smul.u32 4, %s30
      %p325 = scmp.lt.s32.totalorder %s324, 7
      %s326 = scalar_select %p325, %s324, 7
      %s327 = smul.addr %s326, 4
      %s328 = scalar_lea.vmem %s2, %s327
      %p329 = pneg %p77
      %p330 = pneg %p74
      %p331 = pneg %p98
      %p332 = pneg %p95
      %p333 = pneg %p119
      %p334 = pneg %p116
      %p335 = pneg %p140
      %p336 = pneg %p137
      %p337 = pneg %p161
      %p338 = pneg %p158
      %p339 = pneg %p182
      %p340 = pneg %p179
      %p341 = pneg %p203
      %p342 = pneg %p200
      %p343 = pneg %p229
      %p344 = pneg %p226
      %s345 = smul.u32 4, %s30
      %p346 = scmp.lt.s32.totalorder %s345, 7
      %s347 = scalar_select %p346, %s345, 7
      %s348 = smul.addr %s347, 8
      %s349 = scalar_lea.vmem %s9, %s348
      %p350 = pneg %p255
      %p351 = pneg %p252
      %s352 = smul.u32 4, %s30
      %p353 = scmp.lt.s32.totalorder %s352, 7
      %s354 = scalar_select %p353, %s352, 7
      %s355 = smul.addr %s354, 8
      %s356 = scalar_lea.vmem %s10, %s355
      %s357 = smul.u32 4, %s30
      %p358 = scmp.lt.s32.totalorder %s357, 7
      %s359 = scalar_select %p358, %s357, 7
      %s360 = smul.addr %s359, 4
      %s361 = scalar_lea.vmem %s1, %s360
      %s362 = smul.u32 4, %s30
      %s363 = smul.u32 4, %s30
      %p364 = scmp.lt.s32.totalorder %s363, 7
      %s365 = scalar_select %p364, %s363, 7
      %s366 = smul.addr %s365, 4
      %s367 = scalar_lea.vmem %s2, %s366
      %s368 = smul.u32 4, %s30
      %s369 = smul.u32 4, %s30
      %p370 = scmp.lt.s32.totalorder %s369, 7
      %s371 = scalar_select %p370, %s369, 7
      %s372 = smul.addr %s371, 8
      %s373 = scalar_lea.vmem %s9, %s372
      %s374 = smul.u32 4, %s30
      %s375 = smul.u32 4, %s30
      %p376 = scmp.lt.s32.totalorder %s375, 7
      %s377 = scalar_select %p376, %s375, 7
      %s378 = smul.addr %s377, 8
      %s379 = scalar_lea.vmem %s10, %s378
      %s380 = smul.u32 4, %s30
      %s382 = smul.u32 %s30, 4
      %v383 = vld [vmem:[%s361] sm:$0xf]
      %v384 = vld [vmem:[%s361 + $0x4] sm:$0xf]
      %v385 = vld [vmem:[%s361 + $0x8] sm:$0xf]
      %v386 = vld [vmem:[%s361 + $0xc] sm:$0xf]
      %v387 = vunpack.c.l.bf16 %v383
      %v388 = vunpack.c.l.bf16 %v384
      %v389 = vunpack.c.l.bf16 %v385
      %v390 = vunpack.c.l.bf16 %v386
      %v391 = vpack.c.bf16 %v388, %v387
      %v392 = vpack.c.bf16 %v390, %v389
      %v393 = vld [vmem:[%s3] sm:$0xf]
      %v394 = vld [vmem:[%s3 + $0x4] sm:$0xf]
      %v395 = vld [vmem:[%s3 + $0x8] sm:$0xf]
      %v396 = vld [vmem:[%s3 + $0xc] sm:$0xf]
      %v397 = vld [vmem:[%s6] sm:$0x1]
      %v399 = vperm.slane %v397, 0
      %v405 = vunpack.c.l.b16 %v393
      %v406 = vunpack.c.l.b16 %v394
      %v407 = vunpack.c.l.b16 %v395
      %v408 = vunpack.c.l.b16 %v396
      %v409 = vpack.c.b16 %v406, %v405
      %v410 = vpack.c.b16 %v408, %v407
      %vm413 = vcmask 261120
      %v415 = vsel %vm413, %v391, 0
      %v418 = vsel %vm413, %v392, 0
      %420 = vmatpush.bf16.msra.mxu0 0
      %421 = vmatpush.bf16.msra.mxu0 0
      %422 = vmatpush.bf16.msra.mxu0 0
      %423 = vmatpush.bf16.msra.mxu0 0
      %424 = vmatpush.bf16.msra.mxu0 0
      %425 = vmatpush.bf16.msra.mxu0 0
      %426 = vmatpush.bf16.msra.mxu0 %v410
      %427 = vmatpush.bf16.msra.mxu0 %v409
      %428 = vmatmul.bf16.gmra.mxu0 %v415
      %v429 = vpop.f32.mrf.mxu0
      %v430 = vadd.f32 %v399, %v429
      %v431 = vpop.f32.mrf.mxu0
      %v432 = vadd.f32 %v399, %v431
      %433 = vmatmul.bf16.gmra.mxu0 %v418
      %v434 = vpop.f32.mrf.mxu0
      %v435 = vadd.f32 %v399, %v434
      %v436 = vpop.f32.mrf.mxu0
      %v437 = vadd.f32 %v399, %v436
      %438 = vdwg.mxu0
      %v439 = vtanh.pop %v430
      %v440 = vtanh.pop %v432
      %v441 = vtanh.pop %v435
      %v442 = vtanh.pop %v437
      %v443 = vld [vmem:[%s367] sm:$0xf]
      %v444 = vld [vmem:[%s367 + $0x4] sm:$0xf]
      %v445 = vld [vmem:[%s367 + $0x8] sm:$0xf]
      %v446 = vld [vmem:[%s367 + $0xc] sm:$0xf]
      %v447 = vunpack.c.l.bf16 %v443
      %v448 = vunpack.c.l.bf16 %v444
      %v449 = vunpack.c.l.bf16 %v445
      %v450 = vunpack.c.l.bf16 %v446
      %v451 = vpack.c.bf16 %v448, %v447
      %v452 = vpack.c.bf16 %v450, %v449
      %v453 = vld [vmem:[%s4] sm:$0xf]
      %v454 = vld [vmem:[%s4 + $0x4] sm:$0xf]
      %v455 = vld [vmem:[%s4 + $0x8] sm:$0xf]
      %v456 = vld [vmem:[%s4 + $0xc] sm:$0xf]
      %v457 = vld [vmem:[%s7] sm:$0x1]
      %v459 = vperm.slane %v457, 0
      %v465 = vunpack.c.l.b16 %v453
      %v466 = vunpack.c.l.b16 %v454
      %v467 = vunpack.c.l.b16 %v455
      %v468 = vunpack.c.l.b16 %v456
      %v469 = vpack.c.b16 %v466, %v465
      %v470 = vpack.c.b16 %v468, %v467
      %v474 = vsel %vm413, %v451, 0
      %v477 = vsel %vm413, %v452, 0
      %479 = vmatpush.bf16.msra.mxu0 0
      %480 = vmatpush.bf16.msra.mxu0 0
      %481 = vmatpush.bf16.msra.mxu0 0
      %482 = vmatpush.bf16.msra.mxu0 0
      %483 = vmatpush.bf16.msra.mxu0 0
      %484 = vmatpush.bf16.msra.mxu0 0
      %485 = vmatpush.bf16.msra.mxu0 %v470
      %486 = vmatpush.bf16.msra.mxu0 %v469
      %487 = vmatmul.bf16.gmra.mxu0 %v474
      %v488 = vpop.f32.mrf.mxu0
      %v489 = vadd.f32 %v459, %v488
      %v490 = vpop.f32.mrf.mxu0
      %v491 = vadd.f32 %v459, %v490
      %492 = vmatmul.bf16.gmra.mxu0 %v477
      %v493 = vpop.f32.mrf.mxu0
      %v494 = vadd.f32 %v459, %v493
      %v495 = vpop.f32.mrf.mxu0
      %v496 = vadd.f32 %v459, %v495
      %497 = vdwg.mxu0
      %v498 = vtanh.pop %v489
      %v499 = vtanh.pop %v491
      %v500 = vtanh.pop %v494
      %v501 = vtanh.pop %v496
      %v502 = vlaneseq
      %v503 = vand.u32 %v502, 127
      %v504 = vpack.c.bf16 %v439, %v439
      %v505 = vrot.slane %v439, 4
      %v506 = vadd.f32 %v439, %v505
      %v507 = vrot.slane %v506, 2
      %v508 = vadd.f32 %v506, %v507
      %v509 = vrot.slane %v508, 1
      %v510 = vadd.f32 %v508, %v509
      %v511 = vrcp.pop 8.0
      %v512 = vmul.f32 8.0, %v511
      %v513 = vsub.f32 1.0, %v512
      %v514 = vmul.f32 %v511, %v513
      %v515 = vadd.f32 %v511, %v514
      %vm516 = vweird.f32 %v511
      %v517 = vsel %vm516, %v511, %v515
      %v518 = vmul.f32 %v510, %v517
      %v519 = vadd.f32 %v498, %v518
      %v520 = vpack.c.bf16 %v519, %v519
      %521 = vmatpush.bf16.xpose.msra.mxu0 0
      %522 = vmatpush.bf16.xpose.msra.mxu0 0
      %523 = vmatpush.bf16.xpose.msra.mxu0 0
      %524 = vmatpush.bf16.xpose.msra.mxu0 0
      %525 = vmatpush.bf16.xpose.msra.mxu0 0
      %526 = vmatpush.bf16.xpose.msra.mxu0 0
      %527 = vmatpush.bf16.xpose.msra.mxu0 0
      %528 = vmatpush.bf16.xpose.msra.mxu0 %v504
      %529 = vmatmul.bf16.gmra.mxu0 %v520
      %v530 = vpop.f32.mrf.mxu0
      %v531 = vadd.f32 0.0, %v530
      %v532 = vpop.f32.mrf.mxu0
      %533 = vdwg.mxu0
      %s534 = sld [smem:[#allocation3 + %s382]]
      %v535 = vstv %s534
      %vm536 = vcmp.lt.s32.totalorder %v503, %v535
      %v537 = vsel %vm536, %v531, -1e+30
      %vm538 = vcmask 64512
      %v539 = vsel %vm538, %v537, -inf
      %540 = vmax.xlane.f32.xlu0 %v539
      %v541 = vpop.xlane.xlu0 %540
      %v542 = vsub.f32 %v537, %v541
      %v543 = vmul.f32 %v542, 1.442695
      %v544 = vpow.pop %v543
      %v545 = vsel %vm538, %v544, 0.0
      %546 = vadd.xlane.f32.xlu0 %v545
      %v547 = vpop.xlane.xlu0 %546
      %v548 = vrcp.pop %v547
      %v549 = vmul.f32 %v544, %v548
      %550 = vst.msk [vmem:[%s379] sm:$0xff] %vm538, %v549
      %v551 = vpack.c.bf16 %v549, %v549
      %v553 = vsel %vm538, %v551, 0
      %vm555 = vcmask 1043456
      %v557 = vsel %vm555, %v504, 0
      %559 = vmatpush.bf16.msra.mxu0 0
      %560 = vmatpush.bf16.msra.mxu0 0
      %561 = vmatpush.bf16.msra.mxu0 0
      %562 = vmatpush.bf16.msra.mxu0 0
      %563 = vmatpush.bf16.msra.mxu0 0
      %564 = vmatpush.bf16.msra.mxu0 0
      %565 = vmatpush.bf16.msra.mxu0 0
      %566 = vmatpush.bf16.msra.mxu0 %v557
      %567 = vmatmul.bf16.gmra.mxu0 %v553
      %v568 = vpop.f32.mrf.mxu0
      %v569 = vadd.f32 0.0, %v568
      %v570 = vpop.f32.mrf.mxu0
      %571 = vdwg.mxu0
      %v572 = vpack.c.bf16 %v440, %v440
      %v573 = vrot.slane %v440, 4
      %v574 = vadd.f32 %v440, %v573
      %v575 = vrot.slane %v574, 2
      %v576 = vadd.f32 %v574, %v575
      %v577 = vrot.slane %v576, 1
      %v578 = vadd.f32 %v576, %v577
      %v579 = vmul.f32 %v578, %v517
      %v580 = vadd.f32 %v499, %v579
      %v581 = vpack.c.bf16 %v580, %v580
      %582 = vmatpush.bf16.xpose.msra.mxu0 0
      %583 = vmatpush.bf16.xpose.msra.mxu0 0
      %584 = vmatpush.bf16.xpose.msra.mxu0 0
      %585 = vmatpush.bf16.xpose.msra.mxu0 0
      %586 = vmatpush.bf16.xpose.msra.mxu0 0
      %587 = vmatpush.bf16.xpose.msra.mxu0 0
      %588 = vmatpush.bf16.xpose.msra.mxu0 0
      %589 = vmatpush.bf16.xpose.msra.mxu0 %v572
      %590 = vmatmul.bf16.gmra.mxu0 %v581
      %v591 = vpop.f32.mrf.mxu0
      %v592 = vadd.f32 0.0, %v591
      %v593 = vpop.f32.mrf.mxu0
      %594 = vdwg.mxu0
      %s595 = sadd.s32 %s382, 1
      %s596 = sld [smem:[#allocation3 + %s595]]
      %v597 = vstv %s596
      %vm598 = vcmp.lt.s32.totalorder %v503, %v597
      %v599 = vsel %vm598, %v592, -1e+30
      %v600 = vsel %vm538, %v599, -inf
      %601 = vmax.xlane.f32.xlu0 %v600
      %v602 = vpop.xlane.xlu0 %601
      %v603 = vsub.f32 %v599, %v602
      %v604 = vmul.f32 %v603, 1.442695
      %v605 = vpow.pop %v604
      %v606 = vsel %vm538, %v605, 0.0
      %607 = vadd.xlane.f32.xlu0 %v606
      %v608 = vpop.xlane.xlu0 %607
      %v609 = vrcp.pop %v608
      %v610 = vmul.f32 %v605, %v609
      %s611 = scalar_lea.vmem %s379, 8
      %612 = vst.msk [vmem:[%s611] sm:$0xff] %vm538, %v610
      %v613 = vpack.c.bf16 %v610, %v610
      %v615 = vsel %vm538, %v613, 0
      %v618 = vsel %vm555, %v572, 0
      %620 = vmatpush.bf16.msra.mxu0 0
      %621 = vmatpush.bf16.msra.mxu0 0
      %622 = vmatpush.bf16.msra.mxu0 0
      %623 = vmatpush.bf16.msra.mxu0 0
      %624 = vmatpush.bf16.msra.mxu0 0
      %625 = vmatpush.bf16.msra.mxu0 0
      %626 = vmatpush.bf16.msra.mxu0 0
      %627 = vmatpush.bf16.msra.mxu0 %v618
      %628 = vmatmul.bf16.gmra.mxu0 %v615
      %v629 = vpop.f32.mrf.mxu0
      %v630 = vadd.f32 0.0, %v629
      %v631 = vpop.f32.mrf.mxu0
      %632 = vdwg.mxu0
      %v633 = vpack.c.bf16 %v441, %v441
      %v634 = vrot.slane %v441, 4
      %v635 = vadd.f32 %v441, %v634
      %v636 = vrot.slane %v635, 2
      %v637 = vadd.f32 %v635, %v636
      %v638 = vrot.slane %v637, 1
      %v639 = vadd.f32 %v637, %v638
      %v640 = vmul.f32 %v639, %v517
      %v641 = vadd.f32 %v500, %v640
      %v642 = vpack.c.bf16 %v641, %v641
      %643 = vmatpush.bf16.xpose.msra.mxu0 0
      %644 = vmatpush.bf16.xpose.msra.mxu0 0
      %645 = vmatpush.bf16.xpose.msra.mxu0 0
      %646 = vmatpush.bf16.xpose.msra.mxu0 0
      %647 = vmatpush.bf16.xpose.msra.mxu0 0
      %648 = vmatpush.bf16.xpose.msra.mxu0 0
      %649 = vmatpush.bf16.xpose.msra.mxu0 0
      %650 = vmatpush.bf16.xpose.msra.mxu0 %v633
      %651 = vmatmul.bf16.gmra.mxu0 %v642
      %v652 = vpop.f32.mrf.mxu0
      %v653 = vadd.f32 0.0, %v652
      %v654 = vpop.f32.mrf.mxu0
      %655 = vdwg.mxu0
      %s656 = sadd.s32 %s382, 2
      %s657 = sld [smem:[#allocation3 + %s656]]
      %v658 = vstv %s657
      %vm659 = vcmp.lt.s32.totalorder %v503, %v658
      %v660 = vsel %vm659, %v653, -1e+30
      %v661 = vsel %vm538, %v660, -inf
      %662 = vmax.xlane.f32.xlu0 %v661
      %v663 = vpop.xlane.xlu0 %662
      %v664 = vsub.f32 %v660, %v663
      %v665 = vmul.f32 %v664, 1.442695
      %v666 = vpow.pop %v665
      %v667 = vsel %vm538, %v666, 0.0
      %668 = vadd.xlane.f32.xlu0 %v667
      %v669 = vpop.xlane.xlu0 %668
      %v670 = vrcp.pop %v669
      %v671 = vmul.f32 %v666, %v670
      %s672 = scalar_lea.vmem %s379, 16
      %673 = vst.msk [vmem:[%s672] sm:$0xff] %vm538, %v671
      %v674 = vpack.c.bf16 %v671, %v671
      %v676 = vsel %vm538, %v674, 0
      %v679 = vsel %vm555, %v633, 0
      %681 = vmatpush.bf16.msra.mxu0 0
      %682 = vmatpush.bf16.msra.mxu0 0
      %683 = vmatpush.bf16.msra.mxu0 0
      %684 = vmatpush.bf16.msra.mxu0 0
      %685 = vmatpush.bf16.msra.mxu0 0
      %686 = vmatpush.bf16.msra.mxu0 0
      %687 = vmatpush.bf16.msra.mxu0 0
      %688 = vmatpush.bf16.msra.mxu0 %v679
      %689 = vmatmul.bf16.gmra.mxu0 %v676
      %v690 = vpop.f32.mrf.mxu0
      %v691 = vadd.f32 0.0, %v690
      %v692 = vpop.f32.mrf.mxu0
      %693 = vdwg.mxu0
      %v694 = vpack.c.bf16 %v442, %v442
      %v695 = vrot.slane %v442, 4
      %v696 = vadd.f32 %v442, %v695
      %v697 = vrot.slane %v696, 2
      %v698 = vadd.f32 %v696, %v697
      %v699 = vrot.slane %v698, 1
      %v700 = vadd.f32 %v698, %v699
      %v701 = vmul.f32 %v700, %v517
      %v702 = vadd.f32 %v501, %v701
      %v703 = vpack.c.bf16 %v702, %v702
      %704 = vmatpush.bf16.xpose.msra.mxu0 0
      %705 = vmatpush.bf16.xpose.msra.mxu0 0
      %706 = vmatpush.bf16.xpose.msra.mxu0 0
      %707 = vmatpush.bf16.xpose.msra.mxu0 0
      %708 = vmatpush.bf16.xpose.msra.mxu0 0
      %709 = vmatpush.bf16.xpose.msra.mxu0 0
      %710 = vmatpush.bf16.xpose.msra.mxu0 0
      %711 = vmatpush.bf16.xpose.msra.mxu0 %v694
      %712 = vmatmul.bf16.gmra.mxu0 %v703
      %v713 = vpop.f32.mrf.mxu0
      %v714 = vadd.f32 0.0, %v713
      %v715 = vpop.f32.mrf.mxu0
      %716 = vdwg.mxu0
      %s717 = sadd.s32 %s382, 3
      %s718 = sld [smem:[#allocation3 + %s717]]
      %v719 = vstv %s718
      %vm720 = vcmp.lt.s32.totalorder %v503, %v719
      %v721 = vsel %vm720, %v714, -1e+30
      %v722 = vsel %vm538, %v721, -inf
      %723 = vmax.xlane.f32.xlu0 %v722
      %v724 = vpop.xlane.xlu0 %723
      %v725 = vsub.f32 %v721, %v724
      %v726 = vmul.f32 %v725, 1.442695
      %v727 = vpow.pop %v726
      %v728 = vsel %vm538, %v727, 0.0
      %729 = vadd.xlane.f32.xlu0 %v728
      %v730 = vpop.xlane.xlu0 %729
      %v731 = vrcp.pop %v730
      %v732 = vmul.f32 %v727, %v731
      %s733 = scalar_lea.vmem %s379, 24
      %734 = vst.msk [vmem:[%s733] sm:$0xff] %vm538, %v732
      %v735 = vpack.c.bf16 %v732, %v732
      %v737 = vsel %vm538, %v735, 0
      %v740 = vsel %vm555, %v694, 0
      %742 = vmatpush.bf16.msra.mxu0 0
      %743 = vmatpush.bf16.msra.mxu0 0
      %744 = vmatpush.bf16.msra.mxu0 0
      %745 = vmatpush.bf16.msra.mxu0 0
      %746 = vmatpush.bf16.msra.mxu0 0
      %747 = vmatpush.bf16.msra.mxu0 0
      %748 = vmatpush.bf16.msra.mxu0 0
      %749 = vmatpush.bf16.msra.mxu0 %v740
      %750 = vmatmul.bf16.gmra.mxu0 %v737
      %v751 = vpop.f32.mrf.mxu0
      %v752 = vadd.f32 0.0, %v751
      %v753 = vpop.f32.mrf.mxu0
      %754 = vdwg.mxu0
      %v755 = vpack.c.bf16 %v630, %v569
      %v756 = vpack.c.bf16 %v580, %v519
      %v757 = vpack.c.bf16 %v752, %v691
      %v758 = vpack.c.bf16 %v702, %v641
      %v759 = vld [vmem:[%s5] sm:$0xf]
      %v760 = vld [vmem:[%s5 + $0x4] sm:$0xf]
      %v761 = vld [vmem:[%s5 + $0x8] sm:$0xf]
      %v762 = vld [vmem:[%s5 + $0xc] sm:$0xf]
      %v763 = vld [vmem:[%s5 + $0x10] sm:$0xf]
      %v764 = vld [vmem:[%s5 + $0x14] sm:$0xf]
      %v765 = vld [vmem:[%s5 + $0x18] sm:$0xf]
      %v766 = vld [vmem:[%s5 + $0x1c] sm:$0xf]
      %v767 = vld [vmem:[%s5 + $0x20] sm:$0xf]
      %v768 = vld [vmem:[%s5 + $0x24] sm:$0xf]
      %v769 = vld [vmem:[%s5 + $0x28] sm:$0xf]
      %v770 = vld [vmem:[%s5 + $0x2c] sm:$0xf]
      %v771 = vld [vmem:[%s5 + $0x30] sm:$0xf]
      %v772 = vld [vmem:[%s5 + $0x34] sm:$0xf]
      %v773 = vld [vmem:[%s5 + $0x38] sm:$0xf]
      %v774 = vld [vmem:[%s5 + $0x3c] sm:$0xf]
      %v775 = vld [vmem:[%s5 + $0x40] sm:$0xf]
      %v776 = vld [vmem:[%s5 + $0x44] sm:$0xf]
      %v777 = vld [vmem:[%s5 + $0x48] sm:$0xf]
      %v778 = vld [vmem:[%s5 + $0x4c] sm:$0xf]
      %v779 = vld [vmem:[%s5 + $0x50] sm:$0xf]
      %v780 = vld [vmem:[%s5 + $0x54] sm:$0xf]
      %v781 = vld [vmem:[%s5 + $0x58] sm:$0xf]
      %v782 = vld [vmem:[%s5 + $0x5c] sm:$0xf]
      %v783 = vld [vmem:[%s5 + $0x60] sm:$0xf]
      %v784 = vld [vmem:[%s5 + $0x64] sm:$0xf]
      %v785 = vld [vmem:[%s5 + $0x68] sm:$0xf]
      %v786 = vld [vmem:[%s5 + $0x6c] sm:$0xf]
      %v787 = vld [vmem:[%s5 + $0x70] sm:$0xf]
      %v788 = vld [vmem:[%s5 + $0x74] sm:$0xf]
      %v789 = vld [vmem:[%s5 + $0x78] sm:$0xf]
      %v790 = vld [vmem:[%s5 + $0x7c] sm:$0xf]
      %v791 = vld [vmem:[%s8] sm:$0x1]
      %v793 = vperm.slane %v791, 0
      %v827 = vunpack.c.l.b16 %v759
      %v828 = vunpack.c.l.b16 %v760
      %v829 = vunpack.c.l.b16 %v761
      %v830 = vunpack.c.l.b16 %v762
      %v831 = vunpack.c.l.b16 %v763
      %v832 = vunpack.c.l.b16 %v764
      %v833 = vunpack.c.l.b16 %v765
      %v834 = vunpack.c.l.b16 %v766
      %v835 = vunpack.c.l.b16 %v767
      %v836 = vunpack.c.l.b16 %v768
      %v837 = vunpack.c.l.b16 %v769
      %v838 = vunpack.c.l.b16 %v770
      %v839 = vunpack.c.l.b16 %v771
      %v840 = vunpack.c.l.b16 %v772
      %v841 = vunpack.c.l.b16 %v773
      %v842 = vunpack.c.l.b16 %v774
      %v843 = vunpack.c.l.b16 %v775
      %v844 = vunpack.c.l.b16 %v776
      %v845 = vunpack.c.l.b16 %v777
      %v846 = vunpack.c.l.b16 %v778
      %v847 = vunpack.c.l.b16 %v779
      %v848 = vunpack.c.l.b16 %v780
      %v849 = vunpack.c.l.b16 %v781
      %v850 = vunpack.c.l.b16 %v782
      %v851 = vunpack.c.l.b16 %v783
      %v852 = vunpack.c.l.b16 %v784
      %v853 = vunpack.c.l.b16 %v785
      %v854 = vunpack.c.l.b16 %v786
      %v855 = vunpack.c.l.b16 %v787
      %v856 = vunpack.c.l.b16 %v788
      %v857 = vunpack.c.l.b16 %v789
      %v858 = vunpack.c.l.b16 %v790
      %v859 = vpack.c.b16 %v828, %v827
      %v860 = vpack.c.b16 %v830, %v829
      %v861 = vpack.c.b16 %v832, %v831
      %v862 = vpack.c.b16 %v834, %v833
      %v863 = vpack.c.b16 %v836, %v835
      %v864 = vpack.c.b16 %v838, %v837
      %v865 = vpack.c.b16 %v840, %v839
      %v866 = vpack.c.b16 %v842, %v841
      %v867 = vpack.c.b16 %v844, %v843
      %v868 = vpack.c.b16 %v846, %v845
      %v869 = vpack.c.b16 %v848, %v847
      %v870 = vpack.c.b16 %v850, %v849
      %v871 = vpack.c.b16 %v852, %v851
      %v872 = vpack.c.b16 %v854, %v853
      %v873 = vpack.c.b16 %v856, %v855
      %v874 = vpack.c.b16 %v858, %v857
      %891 = vmatpush.bf16.msra.mxu0 %v866
      %892 = vmatpush.bf16.msra.mxu0 %v865
      %893 = vmatpush.bf16.msra.mxu0 %v864
      %894 = vmatpush.bf16.msra.mxu0 %v863
      %895 = vmatpush.bf16.msra.mxu0 %v862
      %896 = vmatpush.bf16.msra.mxu0 %v861
      %897 = vmatpush.bf16.msra.mxu0 %v860
      %898 = vmatpush.bf16.msra.mxu0 %v859
      %899 = vmatmul.bf16.gmra.mxu0 %v755
      %v900 = vpop.f32.mrf.mxu0
      %v901 = vadd.f32 %v793, %v900
      %v902 = vpop.f32.mrf.mxu0
      %v903 = vadd.f32 %v793, %v902
      %904 = vmatmul.bf16.gmra.mxu0 %v757
      %v905 = vpop.f32.mrf.mxu0
      %v906 = vadd.f32 %v793, %v905
      %v907 = vpop.f32.mrf.mxu0
      %v908 = vadd.f32 %v793, %v907
      %909 = vdwg.mxu0
      %910 = vmatpush.bf16.msra.mxu0 %v874
      %911 = vmatpush.bf16.msra.mxu0 %v873
      %912 = vmatpush.bf16.msra.mxu0 %v872
      %913 = vmatpush.bf16.msra.mxu0 %v871
      %914 = vmatpush.bf16.msra.mxu0 %v870
      %915 = vmatpush.bf16.msra.mxu0 %v869
      %916 = vmatpush.bf16.msra.mxu0 %v868
      %917 = vmatpush.bf16.msra.mxu0 %v867
      %918 = vmatmul.bf16.gmra.mxu0 %v756
      %v919 = vpop.f32.mrf.mxu0
      %v920 = vadd.f32 %v901, %v919
      %v921 = vpop.f32.mrf.mxu0
      %v922 = vadd.f32 %v903, %v921
      %923 = vmatmul.bf16.gmra.mxu0 %v758
      %v924 = vpop.f32.mrf.mxu0
      %v925 = vadd.f32 %v906, %v924
      %v926 = vpop.f32.mrf.mxu0
      %v927 = vadd.f32 %v908, %v926
      %928 = vdwg.mxu0
      %v929 = vtanh.pop %v920
      %v930 = vtanh.pop %v922
      %v931 = vtanh.pop %v925
      %v932 = vtanh.pop %v927
      %933 = vst [vmem:[%s373] sm:$0xff] %v929
      %s934 = scalar_lea.vmem %s373, 8
      %935 = vst [vmem:[%s934] sm:$0xff] %v930
      %s936 = scalar_lea.vmem %s373, 16
      %937 = vst [vmem:[%s936] sm:$0xff] %v931
      %s938 = scalar_lea.vmem %s373, 24
      %939 = vst [vmem:[%s938] sm:$0xff] %v932
      %s940 = smul.u32 4, %s30
      %p941 = scmp.lt.s32.totalorder %s940, 7
      %s942 = scalar_select %p941, %s940, 7
      %s943 = smul.addr %s942, 8
      %s944 = scalar_lea.vmem %s9, %s943
      %s945 = smul.u32 4, %s30
      %p946 = scmp.lt.s32.totalorder %s945, 7
      %s947 = scalar_select %p946, %s945, 7
      %s948 = smul.addr %s947, 8
      %s949 = scalar_lea.vmem %s10, %s948
      // Predicated region
      $region53: #{nmt_forward.1} parent=51 // pred_check
        %p950 = pneg %p226
      $region54: #{nmt_forward.1} parent=51 // pred_check_branch
        %952 = sbr.rel (%p950) target = $region56
      $region55: #{nmt_forward.1} parent=51 // pred_region
        %s953 = smul.u32 4, %s30
      $region56: #{nmt_forward.1} parent=51 // pred_fallthru
        _
      // Predicated region
      $region57: #{nmt_forward.1} parent=51 // pred_check
        %p954 = pneg %p252
      $region58: #{nmt_forward.1} parent=51 // pred_check_branch
        %956 = sbr.rel (%p954) target = $region60
      $region59: #{nmt_forward.1} parent=51 // pred_region
        %s957 = smul.u32 4, %s30
      $region60: #{nmt_forward.1} parent=51 // pred_fallthru
        _
    $region52: #{nmt_forward.1} parent=5 // pred_fallthru
      _
    %p958 = scmp.le.s32.totalorder 2, %s25
    // Predicated region
    $region61: #{nmt_forward.1} parent=5 // pred_check
      %p959 = pneg %p958
    $region62: #{nmt_forward.1} parent=5 // pred_check_branch
      %961 = sbr.rel (%p959) target = $region64
    $region63: #{nmt_forward.1} parent=5 // pred_region
      %s962 = ssub.s32 %s25, 2
      // Predicated region
      $region65: #{nmt_forward.1} parent=63 // pred_check
        %p963 = pneg %p232
      $region66: #{nmt_forward.1} parent=63 // pred_check_branch
        %965 = sbr.rel (%p963) target = $region68
      $region67: #{nmt_forward.1} parent=63 // pred_region
        %s966 = smul.u32 4, %s31
        %p967 = scmp.lt.s32.totalorder %s966, 7
        %s968 = scalar_select %p967, %s966, 7
        %s969 = smul.addr %s968, 8
        %s970 = scalar_lea.vmem %s9, %s969
      $region68: #{nmt_forward.1} parent=63 // pred_fallthru
        _
      // Predicated region
      $region69: #{nmt_forward.1} parent=63 // pred_check
        %p971 = pneg %p258
      $region70: #{nmt_forward.1} parent=63 // pred_check_branch
        %973 = sbr.rel (%p971) target = $region72
      $region71: #{nmt_forward.1} parent=63 // pred_region
        %s974 = smul.u32 4, %s31
        %p975 = scmp.lt.s32.totalorder %s974, 7
        %s976 = scalar_select %p975, %s974, 7
        %s977 = smul.addr %s976, 8
        %s978 = scalar_lea.vmem %s10, %s977
      $region72: #{nmt_forward.1} parent=63 // pred_fallthru
        _
    $region64: #{nmt_forward.1} parent=5 // pred_fallthru
      _
  $region6: #{nmt_forward.1} parent=0 // loop_footer
    %s29 = sadd.s32 1, %s25
  $region7: #{nmt_forward.1} parent=0 // loop_footer_branch
    %24 = sbr.rel target = $region3
  $region8: #{nmt_forward.1} parent=0 // loop_exit
    _

</llo_original>
